<compile_context>
chip_gen: v5e
topology: v5e:2x2
jax: 0.10.0
libtpu: 0.0.40
codegen_flags: <defaults>
</compile_context>

<pallas_src>
import math

import jax
import jax.numpy as jnp
from jax.experimental import pallas as pl
from jax.experimental.pallas import tpu as pltpu


# ----------------------------------------------------------------------------
# Fused Pallas kernel: conv_k + conv_v (im2col) + 4-head attention + projection
# ----------------------------------------------------------------------------
def _make_fused_kernel(*, S, L, D, H, GPH, d_k, BB):
    scale = 1.0 / math.sqrt(d_k)

    def kernel(q_ref, ki_ref, vi_ref, wk_ref, bk_ref, wv_ref, bv_ref,
               wl_ref, bl_ref, o_ref):
        # ---- causal convs: one im2col matmul each, over all BB batch rows ----
        # ki/vi rows = (batch-row, time); cols = (tap k, in-channel).
        # wk/wv columns are pre-permuted so output column (cc*L + t) holds conv
        # channel (G*t + cc): the torch .view() head split becomes a free
        # lane-block slice (no in-kernel gather).
        kc_all = jnp.dot(ki_ref[...], wk_ref[...],
                         preferred_element_type=jnp.float32) + bk_ref[...]
        vc_all = jnp.dot(vi_ref[...], wv_ref[...],
                         preferred_element_type=jnp.float32) + bv_ref[...]

        wl = wl_ref[...]                      # (D, D) bf16, loaded once per step
        bl = bl_ref[...]                      # (1, D) f32

        for r in range(BB):                   # static unroll over batch rows
            q = q_ref[r * S:(r + 1) * S, :]   # (S, D) bf16
            kc = kc_all[r * L:(r + 1) * L, :]  # (L, D) f32, cols = (cc, sk)
            vc = vc_all[r * L:(r + 1) * L, :]

            # ---- scores: one (S, d_k) @ (d_k, S) matmul per head -------------
            sc_blocks = []
            vhT_list = []
            for hi in range(H):
                cols = [(hi * GPH + g) * L for g in range(GPH)]
                # K^T / V^T for this head: stack the GPH (time, pos) lane blocks
                # along sublanes -> (d_k, S), rows ordered (g, t).
                khT = jnp.concatenate([kc[:, c:c + L] for c in cols], axis=0)
                vhT = jnp.concatenate([vc[:, c:c + L] for c in cols], axis=0)
                qh = q[:, hi * d_k:(hi + 1) * d_k]                # (S, d_k) bf16
                sc_blocks.append(
                    jnp.dot(qh, khT.astype(jnp.bfloat16),
                            preferred_element_type=jnp.float32))  # (S, S) f32
                vhT_list.append(vhT.astype(jnp.bfloat16))

            # ---- softmax batched over all heads: (H*S, S), f32 ----------------
            sc = jnp.concatenate(sc_blocks, axis=0) * scale
            m = jnp.max(sc, axis=-1, keepdims=True)
            e = jnp.exp(sc - m)
            p = e * pl.reciprocal(jnp.sum(e, axis=-1, keepdims=True), approx=True)
            # TODO(synk): nn.Dropout(p=0.1) on p_attn is skipped (eval-mode identity).
            p = p.astype(jnp.bfloat16)

            # ---- PV: one dot_general per head, then ONE fused projection ------
            x_blocks = []
            for hi in range(H):
                p_h = p[hi * S:(hi + 1) * S, :]                   # (S, S)
                x_blocks.append(jax.lax.dot_general(
                    p_h, vhT_list[hi], (((1,), (1,)), ((), ())),
                    preferred_element_type=jnp.float32))          # (S, d_k)
            x_cat = jnp.concatenate(x_blocks, axis=-1).astype(jnp.bfloat16)  # (S, D)
            out_r = jnp.dot(x_cat, wl, preferred_element_type=jnp.float32) + bl
            o_ref[r * S:(r + 1) * S, :] = out_r.astype(o_ref.dtype)

    return kernel


# ----------------------------------------------------------------------------
# One-time weight preprocessing (hoisted out of the per-call forward path)
# ----------------------------------------------------------------------------
def prepare_params(params, h, seq_len):
    """Transpose conv weights to im2col layout, permute their output columns so
    the torch .view() head split is a free lane-block slice in-kernel, transpose
    w_lin, and cast the matmul operands to bf16.  Call once, reuse every step."""
    D = params['w_lin'].shape[0]
    Cout, Cin, K = params['w_conv_k'].shape
    L = seq_len
    G = D // L
    j = jnp.arange(D)
    perm = G * (j % L) + (j // L)            # kernel output column j <- conv channel perm[j]

    def prep_conv(w, b):
        w_std = jnp.transpose(w, (2, 1, 0))[:, :, perm]          # (K, Cin, D)
        return (w_std.reshape(K * Cin, D).astype(jnp.bfloat16),
                b[perm].reshape(1, D).astype(jnp.float32))

    wk2, bk = prep_conv(params['w_conv_k'], params['b_conv_k'])
    wv2, bv = prep_conv(params['w_conv_v'], params['b_conv_v'])
    return {
        'wk2': wk2, 'bk': bk,
        'wv2': wv2, 'bv': bv,
        'wl': jnp.transpose(params['w_lin']).astype(jnp.bfloat16),   # (in, out)
        'bl': params['b_lin'].reshape(1, D).astype(jnp.float32),
    }


# ----------------------------------------------------------------------------
# Forward wrapper: cheap per-call activation prep + the pallas_call
# ----------------------------------------------------------------------------
def _forward_impl(prep, query, key, value, h, BB):
    B, C, L = query.shape
    D = prep['wl'].shape[0]
    K = prep['wk2'].shape[0] // C
    d_k = D // h
    S = (C * L) // D
    # Layout trick requirements: the row-major .view() of the (C, L) activations
    # splits into D//L channel-groups of width L per attention position.
    assert C == D and D % L == 0 and d_k % L == 0 and S == L, \
        "kernel specialised to the module's 128-channel, L == S layout"
    GPH = d_k // L
    KC = K * C

    # query: torch's row-major .view(B, -1, h, d_k) == zero-cost reshape
    q2 = query.reshape(B * S, D).astype(jnp.bfloat16)

    def im2col(x):                               # (B, C, L) -> (B*L, K*C) bf16
        xt = jnp.transpose(x, (0, 2, 1))         # channel-last (B, L, C)
        xp = jnp.pad(xt, ((0, 0), (K - 1, 0), (0, 0)))        # causal left pad
        cols = jnp.stack([xp[:, k:k + L, :] for k in range(K)], axis=2)
        return cols.reshape(B * L, KC).astype(jnp.bfloat16)

    kimc = im2col(key)
    vimc = im2col(value)

    kernel = _make_fused_kernel(S=S, L=L, D=D, H=h, GPH=GPH, d_k=d_k, BB=BB)

    # NOTE: the weight/bias operands are grid-invariant; pl.Buffered(1) would
    # drop their second pipeline buffer (~0.5 MB of VMEM) but is unnecessary at
    # these sizes, so default double-buffering is kept for robustness.
    out2 = pl.pallas_call(
        kernel,
        out_shape=jax.ShapeDtypeStruct((B * S, D), query.dtype),
        grid=(B // BB,),
        in_specs=[
            pl.BlockSpec((BB * S, D), lambda i: (i, 0)),     # query rows (bf16)
            pl.BlockSpec((BB * L, KC), lambda i: (i, 0)),    # key im2col (bf16)
            pl.BlockSpec((BB * L, KC), lambda i: (i, 0)),    # value im2col (bf16)
            pl.BlockSpec((KC, D), lambda i: (0, 0)),         # w_conv_k (im2col, permuted)
            pl.BlockSpec((1, D), lambda i: (0, 0)),          # b_conv_k (permuted)
            pl.BlockSpec((KC, D), lambda i: (0, 0)),         # w_conv_v
            pl.BlockSpec((1, D), lambda i: (0, 0)),          # b_conv_v
            pl.BlockSpec((D, D), lambda i: (0, 0)),          # w_lin^T
            pl.BlockSpec((1, D), lambda i: (0, 0)),          # b_lin
        ],
        out_specs=pl.BlockSpec((BB * S, D), lambda i: (i, 0)),
        compiler_params=pltpu.CompilerParams(
            dimension_semantics=("parallel",)),
    )(q2, kimc, vimc, prep['wk2'], prep['bk'], prep['wv2'], prep['bv'],
      prep['wl'], prep['bl'])

    return out2.reshape(B, S, D)


_forward_jit = jax.jit(_forward_impl, static_argnums=(4, 5))


def _pick_batch_block(B):
    """Batch rows per grid step: B on 1-TC chips (v5e/v6e), ~B/2 on 2-TC chips."""
    try:
        kind = jax.devices()[0].device_kind.lower()
    except Exception:
        kind = ""
    two_core = ("v7" in kind) or ("7x" in kind) or ("v4" in kind) or ("v5p" in kind)
    BB = max(1, B // 2) if two_core else B
    BB = min(BB, 32)                 # keep per-step VMEM tiny (v7x has 64 MiB)
    while B % BB:                    # grid must tile the batch exactly
        BB -= 1
    return BB


def mha_eog_forward_pallas(prep, query, key, value, h):
    return _forward_jit(prep, query, key, value, h,
                        _pick_batch_block(query.shape[0]))


# ----------------------------------------------------------------------------
# Pure-JAX reference (mirrors the PyTorch module exactly, f32)
# ----------------------------------------------------------------------------
def mha_eog_forward_ref(params, query, key, value, h):
    B = query.shape[0]
    d_model = params['w_lin'].shape[0]
    d_k = d_model // h

    def causal_conv_ref(x, w, b):
        K = w.shape[-1]
        xp = jnp.pad(x, ((0, 0), (0, 0), (K - 1, 0)))
        y = jax.lax.conv_general_dilated(
            xp, w, window_strides=(1,), padding='VALID',
            dimension_numbers=('NCH', 'OIH', 'NCH'))
        return y + b[None, :, None]

    k_conv = causal_conv_ref(key, params['w_conv_k'], params['b_conv_k'])
    v_conv = causal_conv_ref(value, params['w_conv_v'], params['b_conv_v'])

    def split_heads(t):  # == t.view(B, -1, h, d_k).transpose(1, 2)
        return jnp.transpose(t.reshape(B, -1, h, d_k), (0, 2, 1, 3))

    q, k, v = split_heads(query), split_heads(k_conv), split_heads(v_conv)
    scores = jnp.einsum('bhqd,bhkd->bhqk', q, k) / math.sqrt(d_k)
    p = jax.nn.softmax(scores, axis=-1)
    x = jnp.einsum('bhqk,bhkd->bhqd', p, v)
    S = x.shape[2]
    x = jnp.transpose(x, (0, 2, 1, 3)).reshape(B, S, h * d_k)
    return x @ params['w_lin'].T + params['b_lin']


# ----------------------------------------------------------------------------
if __name__ == "__main__":
    H_HEADS = 4
    D_MODEL = 128        # fixed by the module's CausalConv1d(128, 128, 7)
    B, C, L = 2, 128, 16
    KSIZE = 7

    root = jax.random.PRNGKey(0)
    ks = jax.random.split(root, 16)
    params = {
        'w_conv_k': 0.05 * jax.random.normal(ks[0], (128, 128, KSIZE), jnp.float32),
        'b_conv_k': 0.05 * jax.random.normal(ks[1], (128,), jnp.float32),
        'w_conv_v': 0.05 * jax.random.normal(ks[2], (128, 128, KSIZE), jnp.float32),
        'b_conv_v': 0.05 * jax.random.normal(ks[3], (128,), jnp.float32),
        'w_lin':    0.05 * jax.random.normal(ks[4], (D_MODEL, D_MODEL), jnp.float32),
        'b_lin':    0.05 * jax.random.normal(ks[5], (D_MODEL,), jnp.float32),
    }
    query = jax.random.normal(ks[6], (B, C, L), jnp.float32)
    key = jax.random.normal(ks[7], (B, C, L), jnp.float32)
    value = jax.random.normal(ks[8], (B, C, L), jnp.float32)

    # One-time weight prep (hoisted out of the per-call jitted path).
    prep = jax.tree_util.tree_map(jax.block_until_ready,
                                  prepare_params(params, H_HEADS, seq_len=L))

    out = mha_eog_forward_pallas(prep, query, key, value, H_HEADS)
    out = jax.block_until_ready(out)

    ref = jax.block_until_ready(mha_eog_forward_ref(params, query, key, value, H_HEADS))
    assert out.shape == (B, (C * L) // D_MODEL, D_MODEL), out.shape
    max_err = float(jnp.max(jnp.abs(out - ref)))
    # bf16 matmul operands (per perf review) need a slightly looser tolerance
    # than the all-f32 variant; f32 accumulation keeps errors ~1e-2.
    assert jnp.allclose(out, ref, rtol=3e-2, atol=3e-2), max_err

    print("KERNEL_OK")
</pallas_src>

<mosaic_0001>
module attributes {stable_mosaic.version = 11 : i64} {
  func.func @kernel(%arg0: i32, %arg1: memref<32x128xbf16, #tpu.memory_space<vmem>>, %arg2: memref<32x896xbf16, #tpu.memory_space<vmem>>, %arg3: memref<32x896xbf16, #tpu.memory_space<vmem>>, %arg4: memref<896x128xbf16, #tpu.memory_space<vmem>>, %arg5: memref<1x128xf32, #tpu.memory_space<vmem>>, %arg6: memref<896x128xbf16, #tpu.memory_space<vmem>>, %arg7: memref<1x128xf32, #tpu.memory_space<vmem>>, %arg8: memref<128x128xbf16, #tpu.memory_space<vmem>>, %arg9: memref<1x128xf32, #tpu.memory_space<vmem>>, %arg10: memref<32x128xf32, #tpu.memory_space<vmem>>) attributes {dimension_semantics = [#tpu.dimension_semantics<parallel>], iteration_bounds = array<i64: 1>, scalar_prefetch = 0 : i64, scratch_operands = 0 : i64, tpu.core_type = #tpu.core_type<tc>, window_params = [{transform_indices = @transform_0, window_bounds = array<i64: 32, 128>}, {transform_indices = @transform_1, window_bounds = array<i64: 32, 896>}, {transform_indices = @transform_2, window_bounds = array<i64: 32, 896>}, {pipeline_mode = #tpu.pipeline_mode<synchronous>, transform_indices = @transform_3, window_bounds = array<i64: 896, 128>}, {pipeline_mode = #tpu.pipeline_mode<synchronous>, transform_indices = @transform_4, window_bounds = array<i64: 1, 128>}, {pipeline_mode = #tpu.pipeline_mode<synchronous>, transform_indices = @transform_5, window_bounds = array<i64: 896, 128>}, {pipeline_mode = #tpu.pipeline_mode<synchronous>, transform_indices = @transform_6, window_bounds = array<i64: 1, 128>}, {pipeline_mode = #tpu.pipeline_mode<synchronous>, transform_indices = @transform_7, window_bounds = array<i64: 128, 128>}, {pipeline_mode = #tpu.pipeline_mode<synchronous>, transform_indices = @transform_8, window_bounds = array<i64: 1, 128>}, {transform_indices = @transform_9, window_bounds = array<i64: 32, 128>}]} {
    %c0 = arith.constant 0 : index
    %c0_0 = arith.constant 0 : index
    %0 = vector.load %arg2[%c0, %c0_0] : memref<32x896xbf16, #tpu.memory_space<vmem>>, vector<32x896xbf16>
    %c0_1 = arith.constant 0 : index
    %c0_2 = arith.constant 0 : index
    %1 = vector.load %arg4[%c0_1, %c0_2] : memref<896x128xbf16, #tpu.memory_space<vmem>>, vector<896x128xbf16>
    %cst = arith.constant dense<0.000000e+00> : vector<32x128xf32>
    %2 = tpu.matmul %0, %1, %cst {dimension_numbers = #tpu.dot_dimension_numbers<[1], [0], [0], [1], [0, 0, 1, 1], [], []>} : vector<32x896xbf16>, vector<896x128xbf16>, vector<32x128xf32> -> vector<32x128xf32>
    %c0_3 = arith.constant 0 : index
    %c0_4 = arith.constant 0 : index
    %3 = vector.load %arg5[%c0_3, %c0_4] : memref<1x128xf32, #tpu.memory_space<vmem>>, vector<1x128xf32>
    %4 = vector.broadcast %3 : vector<1x128xf32> to vector<32x128xf32>
    %5 = arith.addf %2, %4 : vector<32x128xf32>
    %c0_5 = arith.constant 0 : index
    %c0_6 = arith.constant 0 : index
    %6 = vector.load %arg3[%c0_5, %c0_6] : memref<32x896xbf16, #tpu.memory_space<vmem>>, vector<32x896xbf16>
    %c0_7 = arith.constant 0 : index
    %c0_8 = arith.constant 0 : index
    %7 = vector.load %arg6[%c0_7, %c0_8] : memref<896x128xbf16, #tpu.memory_space<vmem>>, vector<896x128xbf16>
    %cst_9 = arith.constant dense<0.000000e+00> : vector<32x128xf32>
    %8 = tpu.matmul %6, %7, %cst_9 {dimension_numbers = #tpu.dot_dimension_numbers<[1], [0], [0], [1], [0, 0, 1, 1], [], []>} : vector<32x896xbf16>, vector<896x128xbf16>, vector<32x128xf32> -> vector<32x128xf32>
    %c0_10 = arith.constant 0 : index
    %c0_11 = arith.constant 0 : index
    %9 = vector.load %arg7[%c0_10, %c0_11] : memref<1x128xf32, #tpu.memory_space<vmem>>, vector<1x128xf32>
    %10 = vector.broadcast %9 : vector<1x128xf32> to vector<32x128xf32>
    %11 = arith.addf %8, %10 : vector<32x128xf32>
    %c0_12 = arith.constant 0 : index
    %c0_13 = arith.constant 0 : index
    %12 = vector.load %arg8[%c0_12, %c0_13] : memref<128x128xbf16, #tpu.memory_space<vmem>>, vector<128x128xbf16>
    %c0_14 = arith.constant 0 : index
    %c0_15 = arith.constant 0 : index
    %13 = vector.load %arg9[%c0_14, %c0_15] : memref<1x128xf32, #tpu.memory_space<vmem>>, vector<1x128xf32>
    %c0_16 = arith.constant 0 : index
    %c0_17 = arith.constant 0 : index
    %14 = vector.load %arg1[%c0_16, %c0_17] : memref<32x128xbf16, #tpu.memory_space<vmem>>, vector<16x128xbf16>
    %15 = vector.extract_strided_slice %5 {offsets = [0, 0], sizes = [16, 128], strides = [1, 1]} : vector<32x128xf32> to vector<16x128xf32>
    %16 = vector.extract_strided_slice %11 {offsets = [0, 0], sizes = [16, 128], strides = [1, 1]} : vector<32x128xf32> to vector<16x128xf32>
    %17 = vector.extract_strided_slice %15 {offsets = [0, 0], sizes = [16, 16], strides = [1, 1]} : vector<16x128xf32> to vector<16x16xf32>
    %18 = vector.extract_strided_slice %15 {offsets = [0, 16], sizes = [16, 16], strides = [1, 1]} : vector<16x128xf32> to vector<16x16xf32>
    %19 = tpu.concatenate %17, %18 in 0 : vector<16x16xf32>, vector<16x16xf32> -> vector<32x16xf32>
    %20 = vector.extract_strided_slice %16 {offsets = [0, 0], sizes = [16, 16], strides = [1, 1]} : vector<16x128xf32> to vector<16x16xf32>
    %21 = vector.extract_strided_slice %16 {offsets = [0, 16], sizes = [16, 16], strides = [1, 1]} : vector<16x128xf32> to vector<16x16xf32>
    %22 = tpu.concatenate %20, %21 in 0 : vector<16x16xf32>, vector<16x16xf32> -> vector<32x16xf32>
    %23 = vector.extract_strided_slice %14 {offsets = [0, 0], sizes = [16, 32], strides = [1, 1]} : vector<16x128xbf16> to vector<16x32xbf16>
    %24 = arith.truncf %19 : vector<32x16xf32> to vector<32x16xbf16>
    %cst_18 = arith.constant dense<0.000000e+00> : vector<16x16xf32>
    %25 = tpu.matmul %23, %24, %cst_18 {dimension_numbers = #tpu.dot_dimension_numbers<[1], [0], [0], [1], [0, 0, 1, 1], [], []>} : vector<16x32xbf16>, vector<32x16xbf16>, vector<16x16xf32> -> vector<16x16xf32>
    %26 = arith.truncf %22 : vector<32x16xf32> to vector<32x16xbf16>
    %27 = vector.extract_strided_slice %15 {offsets = [0, 32], sizes = [16, 16], strides = [1, 1]} : vector<16x128xf32> to vector<16x16xf32>
    %28 = vector.extract_strided_slice %15 {offsets = [0, 48], sizes = [16, 16], strides = [1, 1]} : vector<16x128xf32> to vector<16x16xf32>
    %29 = tpu.concatenate %27, %28 in 0 : vector<16x16xf32>, vector<16x16xf32> -> vector<32x16xf32>
    %30 = vector.extract_strided_slice %16 {offsets = [0, 32], sizes = [16, 16], strides = [1, 1]} : vector<16x128xf32> to vector<16x16xf32>
    %31 = vector.extract_strided_slice %16 {offsets = [0, 48], sizes = [16, 16], strides = [1, 1]} : vector<16x128xf32> to vector<16x16xf32>
    %32 = tpu.concatenate %30, %31 in 0 : vector<16x16xf32>, vector<16x16xf32> -> vector<32x16xf32>
    %33 = vector.extract_strided_slice %14 {offsets = [0, 32], sizes = [16, 32], strides = [1, 1]} : vector<16x128xbf16> to vector<16x32xbf16>
    %34 = arith.truncf %29 : vector<32x16xf32> to vector<32x16xbf16>
    %cst_19 = arith.constant dense<0.000000e+00> : vector<16x16xf32>
    %35 = tpu.matmul %33, %34, %cst_19 {dimension_numbers = #tpu.dot_dimension_numbers<[1], [0], [0], [1], [0, 0, 1, 1], [], []>} : vector<16x32xbf16>, vector<32x16xbf16>, vector<16x16xf32> -> vector<16x16xf32>
    %36 = arith.truncf %32 : vector<32x16xf32> to vector<32x16xbf16>
    %37 = vector.extract_strided_slice %15 {offsets = [0, 64], sizes = [16, 16], strides = [1, 1]} : vector<16x128xf32> to vector<16x16xf32>
    %38 = vector.extract_strided_slice %15 {offsets = [0, 80], sizes = [16, 16], strides = [1, 1]} : vector<16x128xf32> to vector<16x16xf32>
    %39 = tpu.concatenate %37, %38 in 0 : vector<16x16xf32>, vector<16x16xf32> -> vector<32x16xf32>
    %40 = vector.extract_strided_slice %16 {offsets = [0, 64], sizes = [16, 16], strides = [1, 1]} : vector<16x128xf32> to vector<16x16xf32>
    %41 = vector.extract_strided_slice %16 {offsets = [0, 80], sizes = [16, 16], strides = [1, 1]} : vector<16x128xf32> to vector<16x16xf32>
    %42 = tpu.concatenate %40, %41 in 0 : vector<16x16xf32>, vector<16x16xf32> -> vector<32x16xf32>
    %43 = vector.extract_strided_slice %14 {offsets = [0, 64], sizes = [16, 32], strides = [1, 1]} : vector<16x128xbf16> to vector<16x32xbf16>
    %44 = arith.truncf %39 : vector<32x16xf32> to vector<32x16xbf16>
    %cst_20 = arith.constant dense<0.000000e+00> : vector<16x16xf32>
    %45 = tpu.matmul %43, %44, %cst_20 {dimension_numbers = #tpu.dot_dimension_numbers<[1], [0], [0], [1], [0, 0, 1, 1], [], []>} : vector<16x32xbf16>, vector<32x16xbf16>, vector<16x16xf32> -> vector<16x16xf32>
    %46 = arith.truncf %42 : vector<32x16xf32> to vector<32x16xbf16>
    %47 = vector.extract_strided_slice %15 {offsets = [0, 96], sizes = [16, 16], strides = [1, 1]} : vector<16x128xf32> to vector<16x16xf32>
    %48 = vector.extract_strided_slice %15 {offsets = [0, 112], sizes = [16, 16], strides = [1, 1]} : vector<16x128xf32> to vector<16x16xf32>
    %49 = tpu.concatenate %47, %48 in 0 : vector<16x16xf32>, vector<16x16xf32> -> vector<32x16xf32>
    %50 = vector.extract_strided_slice %16 {offsets = [0, 96], sizes = [16, 16], strides = [1, 1]} : vector<16x128xf32> to vector<16x16xf32>
    %51 = vector.extract_strided_slice %16 {offsets = [0, 112], sizes = [16, 16], strides = [1, 1]} : vector<16x128xf32> to vector<16x16xf32>
    %52 = tpu.concatenate %50, %51 in 0 : vector<16x16xf32>, vector<16x16xf32> -> vector<32x16xf32>
    %53 = vector.extract_strided_slice %14 {offsets = [0, 96], sizes = [16, 32], strides = [1, 1]} : vector<16x128xbf16> to vector<16x32xbf16>
    %54 = arith.truncf %49 : vector<32x16xf32> to vector<32x16xbf16>
    %cst_21 = arith.constant dense<0.000000e+00> : vector<16x16xf32>
    %55 = tpu.matmul %53, %54, %cst_21 {dimension_numbers = #tpu.dot_dimension_numbers<[1], [0], [0], [1], [0, 0, 1, 1], [], []>} : vector<16x32xbf16>, vector<32x16xbf16>, vector<16x16xf32> -> vector<16x16xf32>
    %56 = arith.truncf %52 : vector<32x16xf32> to vector<32x16xbf16>
    %57 = tpu.concatenate %25, %35, %45, %55 in 0 : vector<16x16xf32>, vector<16x16xf32>, vector<16x16xf32>, vector<16x16xf32> -> vector<64x16xf32>
    %cst_22 = arith.constant 0.176776692 : f32
    %58 = vector.broadcast %cst_22 : f32 to vector<64x16xf32>
    %59 = arith.mulf %57, %58 : vector<64x16xf32>
    %cst_23 = arith.constant dense<0xFF800000> : vector<64xf32>
    %60 = vector.multi_reduction <maximumf>, %59, %cst_23 [1] : vector<64x16xf32> to vector<64xf32>
    %61 = vector.shape_cast %60 : vector<64xf32> to vector<64x1xf32>
    %62 = vector.broadcast %61 : vector<64x1xf32> to vector<64x16xf32>
    %63 = arith.subf %59, %62 : vector<64x16xf32>
    %64 = math.exp %63 : vector<64x16xf32>
    %cst_24 = arith.constant dense<0.000000e+00> : vector<64xf32>
    %65 = vector.multi_reduction <add>, %64, %cst_24 [1] : vector<64x16xf32> to vector<64xf32>
    %66 = vector.shape_cast %65 : vector<64xf32> to vector<64x1xf32>
    %67 = tpu.reciprocal %66 {approx = true} : vector<64x1xf32> -> vector<64x1xf32>
    %68 = vector.broadcast %67 : vector<64x1xf32> to vector<64x16xf32>
    %69 = arith.mulf %64, %68 : vector<64x16xf32>
    %70 = arith.truncf %69 : vector<64x16xf32> to vector<64x16xbf16>
    %71 = vector.extract_strided_slice %70 {offsets = [0, 0], sizes = [16, 16], strides = [1, 1]} : vector<64x16xbf16> to vector<16x16xbf16>
    %cst_25 = arith.constant dense<0.000000e+00> : vector<16x32xf32>
    %72 = tpu.matmul %71, %26, %cst_25 {dimension_numbers = #tpu.dot_dimension_numbers<[1], [1], [0], [0], [0, 0, 1, 0], [], []>} : vector<16x16xbf16>, vector<32x16xbf16>, vector<16x32xf32> -> vector<16x32xf32>
    %73 = vector.extract_strided_slice %70 {offsets = [16, 0], sizes = [16, 16], strides = [1, 1]} : vector<64x16xbf16> to vector<16x16xbf16>
    %cst_26 = arith.constant dense<0.000000e+00> : vector<16x32xf32>
    %74 = tpu.matmul %73, %36, %cst_26 {dimension_numbers = #tpu.dot_dimension_numbers<[1], [1], [0], [0], [0, 0, 1, 0], [], []>} : vector<16x16xbf16>, vector<32x16xbf16>, vector<16x32xf32> -> vector<16x32xf32>
    %75 = vector.extract_strided_slice %70 {offsets = [32, 0], sizes = [16, 16], strides = [1, 1]} : vector<64x16xbf16> to vector<16x16xbf16>
    %cst_27 = arith.constant dense<0.000000e+00> : vector<16x32xf32>
    %76 = tpu.matmul %75, %46, %cst_27 {dimension_numbers = #tpu.dot_dimension_numbers<[1], [1], [0], [0], [0, 0, 1, 0], [], []>} : vector<16x16xbf16>, vector<32x16xbf16>, vector<16x32xf32> -> vector<16x32xf32>
    %77 = vector.extract_strided_slice %70 {offsets = [48, 0], sizes = [16, 16], strides = [1, 1]} : vector<64x16xbf16> to vector<16x16xbf16>
    %cst_28 = arith.constant dense<0.000000e+00> : vector<16x32xf32>
    %78 = tpu.matmul %77, %56, %cst_28 {dimension_numbers = #tpu.dot_dimension_numbers<[1], [1], [0], [0], [0, 0, 1, 0], [], []>} : vector<16x16xbf16>, vector<32x16xbf16>, vector<16x32xf32> -> vector<16x32xf32>
    %79 = tpu.concatenate %72, %74, %76, %78 in 1 : vector<16x32xf32>, vector<16x32xf32>, vector<16x32xf32>, vector<16x32xf32> -> vector<16x128xf32>
    %80 = arith.truncf %79 : vector<16x128xf32> to vector<16x128xbf16>
    %cst_29 = arith.constant dense<0.000000e+00> : vector<16x128xf32>
    %81 = tpu.matmul %80, %12, %cst_29 {dimension_numbers = #tpu.dot_dimension_numbers<[1], [0], [0], [1], [0, 0, 1, 1], [], []>} : vector<16x128xbf16>, vector<128x128xbf16>, vector<16x128xf32> -> vector<16x128xf32>
    %82 = vector.broadcast %13 : vector<1x128xf32> to vector<16x128xf32>
    %83 = arith.addf %81, %82 : vector<16x128xf32>
    %c0_30 = arith.constant 0 : index
    %c0_31 = arith.constant 0 : index
    %84 = vector.load %arg10[%c0_30, %c0_31] : memref<32x128xf32, #tpu.memory_space<vmem>>, vector<16x128xf32>
    tpu.vector_store %arg10[%c0_30, %c0_31], %83 {strides = array<i32>} : memref<32x128xf32, #tpu.memory_space<vmem>>, vector<16x128xf32>,
    %c16 = arith.constant 16 : index
    %c0_32 = arith.constant 0 : index
    %85 = vector.load %arg1[%c16, %c0_32] : memref<32x128xbf16, #tpu.memory_space<vmem>>, vector<16x128xbf16>
    %86 = vector.extract_strided_slice %5 {offsets = [16, 0], sizes = [16, 128], strides = [1, 1]} : vector<32x128xf32> to vector<16x128xf32>
    %87 = vector.extract_strided_slice %11 {offsets = [16, 0], sizes = [16, 128], strides = [1, 1]} : vector<32x128xf32> to vector<16x128xf32>
    %88 = vector.extract_strided_slice %86 {offsets = [0, 0], sizes = [16, 16], strides = [1, 1]} : vector<16x128xf32> to vector<16x16xf32>
    %89 = vector.extract_strided_slice %86 {offsets = [0, 16], sizes = [16, 16], strides = [1, 1]} : vector<16x128xf32> to vector<16x16xf32>
    %90 = tpu.concatenate %88, %89 in 0 : vector<16x16xf32>, vector<16x16xf32> -> vector<32x16xf32>
    %91 = vector.extract_strided_slice %87 {offsets = [0, 0], sizes = [16, 16], strides = [1, 1]} : vector<16x128xf32> to vector<16x16xf32>
    %92 = vector.extract_strided_slice %87 {offsets = [0, 16], sizes = [16, 16], strides = [1, 1]} : vector<16x128xf32> to vector<16x16xf32>
    %93 = tpu.concatenate %91, %92 in 0 : vector<16x16xf32>, vector<16x16xf32> -> vector<32x16xf32>
    %94 = vector.extract_strided_slice %85 {offsets = [0, 0], sizes = [16, 32], strides = [1, 1]} : vector<16x128xbf16> to vector<16x32xbf16>
    %95 = arith.truncf %90 : vector<32x16xf32> to vector<32x16xbf16>
    %cst_33 = arith.constant dense<0.000000e+00> : vector<16x16xf32>
    %96 = tpu.matmul %94, %95, %cst_33 {dimension_numbers = #tpu.dot_dimension_numbers<[1], [0], [0], [1], [0, 0, 1, 1], [], []>} : vector<16x32xbf16>, vector<32x16xbf16>, vector<16x16xf32> -> vector<16x16xf32>
    %97 = arith.truncf %93 : vector<32x16xf32> to vector<32x16xbf16>
    %98 = vector.extract_strided_slice %86 {offsets = [0, 32], sizes = [16, 16], strides = [1, 1]} : vector<16x128xf32> to vector<16x16xf32>
    %99 = vector.extract_strided_slice %86 {offsets = [0, 48], sizes = [16, 16], strides = [1, 1]} : vector<16x128xf32> to vector<16x16xf32>
    %100 = tpu.concatenate %98, %99 in 0 : vector<16x16xf32>, vector<16x16xf32> -> vector<32x16xf32>
    %101 = vector.extract_strided_slice %87 {offsets = [0, 32], sizes = [16, 16], strides = [1, 1]} : vector<16x128xf32> to vector<16x16xf32>
    %102 = vector.extract_strided_slice %87 {offsets = [0, 48], sizes = [16, 16], strides = [1, 1]} : vector<16x128xf32> to vector<16x16xf32>
    %103 = tpu.concatenate %101, %102 in 0 : vector<16x16xf32>, vector<16x16xf32> -> vector<32x16xf32>
    %104 = vector.extract_strided_slice %85 {offsets = [0, 32], sizes = [16, 32], strides = [1, 1]} : vector<16x128xbf16> to vector<16x32xbf16>
    %105 = arith.truncf %100 : vector<32x16xf32> to vector<32x16xbf16>
    %cst_34 = arith.constant dense<0.000000e+00> : vector<16x16xf32>
    %106 = tpu.matmul %104, %105, %cst_34 {dimension_numbers = #tpu.dot_dimension_numbers<[1], [0], [0], [1], [0, 0, 1, 1], [], []>} : vector<16x32xbf16>, vector<32x16xbf16>, vector<16x16xf32> -> vector<16x16xf32>
    %107 = arith.truncf %103 : vector<32x16xf32> to vector<32x16xbf16>
    %108 = vector.extract_strided_slice %86 {offsets = [0, 64], sizes = [16, 16], strides = [1, 1]} : vector<16x128xf32> to vector<16x16xf32>
    %109 = vector.extract_strided_slice %86 {offsets = [0, 80], sizes = [16, 16], strides = [1, 1]} : vector<16x128xf32> to vector<16x16xf32>
    %110 = tpu.concatenate %108, %109 in 0 : vector<16x16xf32>, vector<16x16xf32> -> vector<32x16xf32>
    %111 = vector.extract_strided_slice %87 {offsets = [0, 64], sizes = [16, 16], strides = [1, 1]} : vector<16x128xf32> to vector<16x16xf32>
    %112 = vector.extract_strided_slice %87 {offsets = [0, 80], sizes = [16, 16], strides = [1, 1]} : vector<16x128xf32> to vector<16x16xf32>
    %113 = tpu.concatenate %111, %112 in 0 : vector<16x16xf32>, vector<16x16xf32> -> vector<32x16xf32>
    %114 = vector.extract_strided_slice %85 {offsets = [0, 64], sizes = [16, 32], strides = [1, 1]} : vector<16x128xbf16> to vector<16x32xbf16>
    %115 = arith.truncf %110 : vector<32x16xf32> to vector<32x16xbf16>
    %cst_35 = arith.constant dense<0.000000e+00> : vector<16x16xf32>
    %116 = tpu.matmul %114, %115, %cst_35 {dimension_numbers = #tpu.dot_dimension_numbers<[1], [0], [0], [1], [0, 0, 1, 1], [], []>} : vector<16x32xbf16>, vector<32x16xbf16>, vector<16x16xf32> -> vector<16x16xf32>
    %117 = arith.truncf %113 : vector<32x16xf32> to vector<32x16xbf16>
    %118 = vector.extract_strided_slice %86 {offsets = [0, 96], sizes = [16, 16], strides = [1, 1]} : vector<16x128xf32> to vector<16x16xf32>
    %119 = vector.extract_strided_slice %86 {offsets = [0, 112], sizes = [16, 16], strides = [1, 1]} : vector<16x128xf32> to vector<16x16xf32>
    %120 = tpu.concatenate %118, %119 in 0 : vector<16x16xf32>, vector<16x16xf32> -> vector<32x16xf32>
    %121 = vector.extract_strided_slice %87 {offsets = [0, 96], sizes = [16, 16], strides = [1, 1]} : vector<16x128xf32> to vector<16x16xf32>
    %122 = vector.extract_strided_slice %87 {offsets = [0, 112], sizes = [16, 16], strides = [1, 1]} : vector<16x128xf32> to vector<16x16xf32>
    %123 = tpu.concatenate %121, %122 in 0 : vector<16x16xf32>, vector<16x16xf32> -> vector<32x16xf32>
    %124 = vector.extract_strided_slice %85 {offsets = [0, 96], sizes = [16, 32], strides = [1, 1]} : vector<16x128xbf16> to vector<16x32xbf16>
    %125 = arith.truncf %120 : vector<32x16xf32> to vector<32x16xbf16>
    %cst_36 = arith.constant dense<0.000000e+00> : vector<16x16xf32>
    %126 = tpu.matmul %124, %125, %cst_36 {dimension_numbers = #tpu.dot_dimension_numbers<[1], [0], [0], [1], [0, 0, 1, 1], [], []>} : vector<16x32xbf16>, vector<32x16xbf16>, vector<16x16xf32> -> vector<16x16xf32>
    %127 = arith.truncf %123 : vector<32x16xf32> to vector<32x16xbf16>
    %128 = tpu.concatenate %96, %106, %116, %126 in 0 : vector<16x16xf32>, vector<16x16xf32>, vector<16x16xf32>, vector<16x16xf32> -> vector<64x16xf32>
    %cst_37 = arith.constant 0.176776692 : f32
    %129 = vector.broadcast %cst_37 : f32 to vector<64x16xf32>
    %130 = arith.mulf %128, %129 : vector<64x16xf32>
    %cst_38 = arith.constant dense<0xFF800000> : vector<64xf32>
    %131 = vector.multi_reduction <maximumf>, %130, %cst_38 [1] : vector<64x16xf32> to vector<64xf32>
    %132 = vector.shape_cast %131 : vector<64xf32> to vector<64x1xf32>
    %133 = vector.broadcast %132 : vector<64x1xf32> to vector<64x16xf32>
    %134 = arith.subf %130, %133 : vector<64x16xf32>
    %135 = math.exp %134 : vector<64x16xf32>
    %cst_39 = arith.constant dense<0.000000e+00> : vector<64xf32>
    %136 = vector.multi_reduction <add>, %135, %cst_39 [1] : vector<64x16xf32> to vector<64xf32>
    %137 = vector.shape_cast %136 : vector<64xf32> to vector<64x1xf32>
    %138 = tpu.reciprocal %137 {approx = true} : vector<64x1xf32> -> vector<64x1xf32>
    %139 = vector.broadcast %138 : vector<64x1xf32> to vector<64x16xf32>
    %140 = arith.mulf %135, %139 : vector<64x16xf32>
    %141 = arith.truncf %140 : vector<64x16xf32> to vector<64x16xbf16>
    %142 = vector.extract_strided_slice %141 {offsets = [0, 0], sizes = [16, 16], strides = [1, 1]} : vector<64x16xbf16> to vector<16x16xbf16>
    %cst_40 = arith.constant dense<0.000000e+00> : vector<16x32xf32>
    %143 = tpu.matmul %142, %97, %cst_40 {dimension_numbers = #tpu.dot_dimension_numbers<[1], [1], [0], [0], [0, 0, 1, 0], [], []>} : vector<16x16xbf16>, vector<32x16xbf16>, vector<16x32xf32> -> vector<16x32xf32>
    %144 = vector.extract_strided_slice %141 {offsets = [16, 0], sizes = [16, 16], strides = [1, 1]} : vector<64x16xbf16> to vector<16x16xbf16>
    %cst_41 = arith.constant dense<0.000000e+00> : vector<16x32xf32>
    %145 = tpu.matmul %144, %107, %cst_41 {dimension_numbers = #tpu.dot_dimension_numbers<[1], [1], [0], [0], [0, 0, 1, 0], [], []>} : vector<16x16xbf16>, vector<32x16xbf16>, vector<16x32xf32> -> vector<16x32xf32>
    %146 = vector.extract_strided_slice %141 {offsets = [32, 0], sizes = [16, 16], strides = [1, 1]} : vector<64x16xbf16> to vector<16x16xbf16>
    %cst_42 = arith.constant dense<0.000000e+00> : vector<16x32xf32>
    %147 = tpu.matmul %146, %117, %cst_42 {dimension_numbers = #tpu.dot_dimension_numbers<[1], [1], [0], [0], [0, 0, 1, 0], [], []>} : vector<16x16xbf16>, vector<32x16xbf16>, vector<16x32xf32> -> vector<16x32xf32>
    %148 = vector.extract_strided_slice %141 {offsets = [48, 0], sizes = [16, 16], strides = [1, 1]} : vector<64x16xbf16> to vector<16x16xbf16>
    %cst_43 = arith.constant dense<0.000000e+00> : vector<16x32xf32>
    %149 = tpu.matmul %148, %127, %cst_43 {dimension_numbers = #tpu.dot_dimension_numbers<[1], [1], [0], [0], [0, 0, 1, 0], [], []>} : vector<16x16xbf16>, vector<32x16xbf16>, vector<16x32xf32> -> vector<16x32xf32>
    %150 = tpu.concatenate %143, %145, %147, %149 in 1 : vector<16x32xf32>, vector<16x32xf32>, vector<16x32xf32>, vector<16x32xf32> -> vector<16x128xf32>
    %151 = arith.truncf %150 : vector<16x128xf32> to vector<16x128xbf16>
    %cst_44 = arith.constant dense<0.000000e+00> : vector<16x128xf32>
    %152 = tpu.matmul %151, %12, %cst_44 {dimension_numbers = #tpu.dot_dimension_numbers<[1], [0], [0], [1], [0, 0, 1, 1], [], []>} : vector<16x128xbf16>, vector<128x128xbf16>, vector<16x128xf32> -> vector<16x128xf32>
    %153 = vector.broadcast %13 : vector<1x128xf32> to vector<16x128xf32>
    %154 = arith.addf %152, %153 : vector<16x128xf32>
    %c16_45 = arith.constant 16 : index
    %c0_46 = arith.constant 0 : index
    %155 = vector.load %arg10[%c16_45, %c0_46] : memref<32x128xf32, #tpu.memory_space<vmem>>, vector<16x128xf32>
    tpu.vector_store %arg10[%c16_45, %c0_46], %154 {strides = array<i32>} : memref<32x128xf32, #tpu.memory_space<vmem>>, vector<16x128xf32>,
    return
  }
  func.func @transform_0(%arg0: i32) -> (i32, i32) {
    %c0_i32 = arith.constant 0 : i32
    %c0_i32_0 = arith.constant 0 : i32
    return %arg0, %c0_i32 : i32, i32
  }
  func.func @transform_1(%arg0: i32) -> (i32, i32) {
    %c0_i32 = arith.constant 0 : i32
    %c0_i32_0 = arith.constant 0 : i32
    return %arg0, %c0_i32 : i32, i32
  }
  func.func @transform_2(%arg0: i32) -> (i32, i32) {
    %c0_i32 = arith.constant 0 : i32
    %c0_i32_0 = arith.constant 0 : i32
    return %arg0, %c0_i32 : i32, i32
  }
  func.func @transform_3(%arg0: i32) -> (i32, i32) {
    %c0_i32 = arith.constant 0 : i32
    %c0_i32_0 = arith.constant 0 : i32
    %c0_i32_1 = arith.constant 0 : i32
    return %c0_i32, %c0_i32_0 : i32, i32
  }
  func.func @transform_4(%arg0: i32) -> (i32, i32) {
    %c0_i32 = arith.constant 0 : i32
    %c0_i32_0 = arith.constant 0 : i32
    %c0_i32_1 = arith.constant 0 : i32
    return %c0_i32, %c0_i32_0 : i32, i32
  }
  func.func @transform_5(%arg0: i32) -> (i32, i32) {
    %c0_i32 = arith.constant 0 : i32
    %c0_i32_0 = arith.constant 0 : i32
    %c0_i32_1 = arith.constant 0 : i32
    return %c0_i32, %c0_i32_0 : i32, i32
  }
  func.func @transform_6(%arg0: i32) -> (i32, i32) {
    %c0_i32 = arith.constant 0 : i32
    %c0_i32_0 = arith.constant 0 : i32
    %c0_i32_1 = arith.constant 0 : i32
    return %c0_i32, %c0_i32_0 : i32, i32
  }
  func.func @transform_7(%arg0: i32) -> (i32, i32) {
    %c0_i32 = arith.constant 0 : i32
    %c0_i32_0 = arith.constant 0 : i32
    %c0_i32_1 = arith.constant 0 : i32
    return %c0_i32, %c0_i32_0 : i32, i32
  }
  func.func @transform_8(%arg0: i32) -> (i32, i32) {
    %c0_i32 = arith.constant 0 : i32
    %c0_i32_0 = arith.constant 0 : i32
    %c0_i32_1 = arith.constant 0 : i32
    return %c0_i32, %c0_i32_0 : i32, i32
  }
  func.func @transform_9(%arg0: i32) -> (i32, i32) {
    %c0_i32 = arith.constant 0 : i32
    %c0_i32_0 = arith.constant 0 : i32
    return %arg0, %c0_i32 : i32, i32
  }
}

</mosaic_0001>

<llo_original>
// kernel: _forward_impl.1
$region0: #{_forward_impl.1}
  #allocation0 [shape = 'u32[]', space=smem, size = 0x4, offset = 0x4, fixed_abs, tag = 'smem constant byte address 0x4 - core index']
  #allocation1 [shape = 'u32[72,128]{1,0:T(1,128)}', space=vmem, size = 0x9000, scoped, tag = 'internal scratch']
  %s0 = inlined_call_operand.vmem [shape: bf16[32,128], index: 0, kind: input, shape index: {}]
  %s1 = inlined_call_operand.vmem [shape: bf16[32,896], index: 1, kind: input, shape index: {}]
  %s2 = inlined_call_operand.vmem [shape: bf16[32,896], index: 2, kind: input, shape index: {}]
  %s3 = inlined_call_operand.vmem [shape: bf16[896,128], index: 3, kind: input, shape index: {}]
  %s4 = inlined_call_operand.vmem [shape: f32[1,128], index: 4, kind: input, shape index: {}]
  %s5 = inlined_call_operand.vmem [shape: bf16[896,128], index: 5, kind: input, shape index: {}]
  %s6 = inlined_call_operand.vmem [shape: f32[1,128], index: 6, kind: input, shape index: {}]
  %s7 = inlined_call_operand.vmem [shape: bf16[128,128], index: 7, kind: input, shape index: {}]
  %s8 = inlined_call_operand.vmem [shape: f32[1,128], index: 8, kind: input, shape index: {}]
  %s9 = inlined_call_operand.hbm [shape: f32[32,128], index: 9, kind: output, shape index: {}]
  %s10 = sld [smem:[#allocation0]]
  $region46: #{_forward_impl.1} parent=0
    _
  %s12 = ssub.s32 1, %s10
  %s13 = scalar_select 0, %s12, %s10
  $region1: #{_forward_impl.1} parent=0
    #allocation2 [shape = 'u8[16384]{0}', space=vmem, size = 0x4000, scoped, tag = 'output window, operand 0, single buffered']
    #allocation3 [shape = 's32[1]{0}', space=sflag, size = 0x4, scoped, tag = 'scoped memory for _forward_impl.1']
    %14 = vsyncpa [#allocation3], 0
    // Predicated region
    $region2: #{_forward_impl.1} parent=1 // pred_check
      _
    $region3: #{_forward_impl.1} parent=1 // pred_check_branch
      %16 = sbr.rel (0) target = $region5
    $region4: #{_forward_impl.1} parent=1 // pred_region
      _
    $region5: #{_forward_impl.1} parent=1 // pred_fallthru
      _
    // Predicated region
    $region6: #{_forward_impl.1} parent=1 // pred_check
      _
    $region7: #{_forward_impl.1} parent=1 // pred_check_branch
      %18 = sbr.rel (0) target = $region9
    $region8: #{_forward_impl.1} parent=1 // pred_region
      _
    $region9: #{_forward_impl.1} parent=1 // pred_fallthru
      _
    // Predicated region
    $region10: #{_forward_impl.1} parent=1 // pred_check
      _
    $region11: #{_forward_impl.1} parent=1 // pred_check_branch
      %20 = sbr.rel (0) target = $region13
    $region12: #{_forward_impl.1} parent=1 // pred_region
      _
    $region13: #{_forward_impl.1} parent=1 // pred_fallthru
      _
    // Predicated region
    $region14: #{_forward_impl.1} parent=1 // pred_check
      _
    $region15: #{_forward_impl.1} parent=1 // pred_check_branch
      %22 = sbr.rel (0) target = $region17
    $region16: #{_forward_impl.1} parent=1 // pred_region
      _
    $region17: #{_forward_impl.1} parent=1 // pred_fallthru
      _
    // Predicated region
    $region18: #{_forward_impl.1} parent=1 // pred_check
      _
    $region19: #{_forward_impl.1} parent=1 // pred_check_branch
      %24 = sbr.rel (0) target = $region21
    $region20: #{_forward_impl.1} parent=1 // pred_region
      _
    $region21: #{_forward_impl.1} parent=1 // pred_fallthru
      _
    // Predicated region
    $region22: #{_forward_impl.1} parent=1 // pred_check
      _
    $region23: #{_forward_impl.1} parent=1 // pred_check_branch
      %26 = sbr.rel (0) target = $region25
    $region24: #{_forward_impl.1} parent=1 // pred_region
      _
    $region25: #{_forward_impl.1} parent=1 // pred_fallthru
      _
    // Predicated region
    $region26: #{_forward_impl.1} parent=1 // pred_check
      _
    $region27: #{_forward_impl.1} parent=1 // pred_check_branch
      %28 = sbr.rel (0) target = $region29
    $region28: #{_forward_impl.1} parent=1 // pred_region
      _
    $region29: #{_forward_impl.1} parent=1 // pred_fallthru
      _
    // Predicated region
    $region30: #{_forward_impl.1} parent=1 // pred_check
      _
    $region31: #{_forward_impl.1} parent=1 // pred_check_branch
      %30 = sbr.rel (0) target = $region33
    $region32: #{_forward_impl.1} parent=1 // pred_region
      _
    $region33: #{_forward_impl.1} parent=1 // pred_fallthru
      _
    // Predicated region
    $region34: #{_forward_impl.1} parent=1 // pred_check
      _
    $region35: #{_forward_impl.1} parent=1 // pred_check_branch
      %32 = sbr.rel (0) target = $region37
    $region36: #{_forward_impl.1} parent=1 // pred_region
      _
    $region37: #{_forward_impl.1} parent=1 // pred_fallthru
      _
    %v34 = vld [vmem:[%s1] sm:$0xff]
    %v35 = vld [vmem:[%s1 + $0x8] sm:$0xff]
    %v36 = vld [vmem:[%s1 + $0x10] sm:$0xff]
    %v37 = vld [vmem:[%s1 + $0x18] sm:$0xf]
    %v38 = vld [vmem:[%s1 + $0x1c] sm:$0xff]
    %v39 = vld [vmem:[%s1 + $0x24] sm:$0xff]
    %v40 = vld [vmem:[%s1 + $0x2c] sm:$0xff]
    %v41 = vld [vmem:[%s1 + $0x34] sm:$0xf]
    %v42 = vld [vmem:[%s1 + $0x38] sm:$0xff]
    %v43 = vld [vmem:[%s1 + $0x40] sm:$0xff]
    %v44 = vld [vmem:[%s1 + $0x48] sm:$0xff]
    %v45 = vld [vmem:[%s1 + $0x50] sm:$0xf]
    %v46 = vld [vmem:[%s1 + $0x54] sm:$0xff]
    %v47 = vld [vmem:[%s1 + $0x5c] sm:$0xff]
    %v48 = vld [vmem:[%s1 + $0x64] sm:$0xff]
    %v49 = vld [vmem:[%s1 + $0x6c] sm:$0xf]
    %v50 = vld [vmem:[%s3] sm:$0xf]
    %v51 = vld [vmem:[%s3 + $0x4] sm:$0xf]
    %v52 = vld [vmem:[%s3 + $0x8] sm:$0xf]
    %v53 = vld [vmem:[%s3 + $0xc] sm:$0xf]
    %v54 = vld [vmem:[%s3 + $0x10] sm:$0xf]
    %v55 = vld [vmem:[%s3 + $0x14] sm:$0xf]
    %v56 = vld [vmem:[%s3 + $0x18] sm:$0xf]
    %v57 = vld [vmem:[%s3 + $0x1c] sm:$0xf]
    %v58 = vld [vmem:[%s3 + $0x20] sm:$0xf]
    %v59 = vld [vmem:[%s3 + $0x24] sm:$0xf]
    %v60 = vld [vmem:[%s3 + $0x28] sm:$0xf]
    %v61 = vld [vmem:[%s3 + $0x2c] sm:$0xf]
    %v62 = vld [vmem:[%s3 + $0x30] sm:$0xf]
    %v63 = vld [vmem:[%s3 + $0x34] sm:$0xf]
    %v64 = vld [vmem:[%s3 + $0x38] sm:$0xf]
    %v65 = vld [vmem:[%s3 + $0x3c] sm:$0xf]
    %v66 = vld [vmem:[%s3 + $0x40] sm:$0xf]
    %v67 = vld [vmem:[%s3 + $0x44] sm:$0xf]
    %v68 = vld [vmem:[%s3 + $0x48] sm:$0xf]
    %v69 = vld [vmem:[%s3 + $0x4c] sm:$0xf]
    %v70 = vld [vmem:[%s3 + $0x50] sm:$0xf]
    %v71 = vld [vmem:[%s3 + $0x54] sm:$0xf]
    %v72 = vld [vmem:[%s3 + $0x58] sm:$0xf]
    %v73 = vld [vmem:[%s3 + $0x5c] sm:$0xf]
    %v74 = vld [vmem:[%s3 + $0x60] sm:$0xf]
    %v75 = vld [vmem:[%s3 + $0x64] sm:$0xf]
    %v76 = vld [vmem:[%s3 + $0x68] sm:$0xf]
    %v77 = vld [vmem:[%s3 + $0x6c] sm:$0xf]
    %v78 = vld [vmem:[%s3 + $0x70] sm:$0xf]
    %v79 = vld [vmem:[%s3 + $0x74] sm:$0xf]
    %v80 = vld [vmem:[%s3 + $0x78] sm:$0xf]
    %v81 = vld [vmem:[%s3 + $0x7c] sm:$0xf]
    %v82 = vld [vmem:[%s3 + $0x80] sm:$0xf]
    %v83 = vld [vmem:[%s3 + $0x84] sm:$0xf]
    %v84 = vld [vmem:[%s3 + $0x88] sm:$0xf]
    %v85 = vld [vmem:[%s3 + $0x8c] sm:$0xf]
    %v86 = vld [vmem:[%s3 + $0x90] sm:$0xf]
    %v87 = vld [vmem:[%s3 + $0x94] sm:$0xf]
    %v88 = vld [vmem:[%s3 + $0x98] sm:$0xf]
    %v89 = vld [vmem:[%s3 + $0x9c] sm:$0xf]
    %v90 = vld [vmem:[%s3 + $0xa0] sm:$0xf]
    %v91 = vld [vmem:[%s3 + $0xa4] sm:$0xf]
    %v92 = vld [vmem:[%s3 + $0xa8] sm:$0xf]
    %v93 = vld [vmem:[%s3 + $0xac] sm:$0xf]
    %v94 = vld [vmem:[%s3 + $0xb0] sm:$0xf]
    %v95 = vld [vmem:[%s3 + $0xb4] sm:$0xf]
    %v96 = vld [vmem:[%s3 + $0xb8] sm:$0xf]
    %v97 = vld [vmem:[%s3 + $0xbc] sm:$0xf]
    %v98 = vld [vmem:[%s3 + $0xc0] sm:$0xf]
    %v99 = vld [vmem:[%s3 + $0xc4] sm:$0xf]
    %v100 = vld [vmem:[%s3 + $0xc8] sm:$0xf]
    %v101 = vld [vmem:[%s3 + $0xcc] sm:$0xf]
    %v102 = vld [vmem:[%s3 + $0xd0] sm:$0xf]
    %v103 = vld [vmem:[%s3 + $0xd4] sm:$0xf]
    %v104 = vld [vmem:[%s3 + $0xd8] sm:$0xf]
    %v105 = vld [vmem:[%s3 + $0xdc] sm:$0xf]
    %v106 = vld [vmem:[%s3 + $0xe0] sm:$0xf]
    %v107 = vld [vmem:[%s3 + $0xe4] sm:$0xf]
    %v108 = vld [vmem:[%s3 + $0xe8] sm:$0xf]
    %v109 = vld [vmem:[%s3 + $0xec] sm:$0xf]
    %v110 = vld [vmem:[%s3 + $0xf0] sm:$0xf]
    %v111 = vld [vmem:[%s3 + $0xf4] sm:$0xf]
    %v112 = vld [vmem:[%s3 + $0xf8] sm:$0xf]
    %v113 = vld [vmem:[%s3 + $0xfc] sm:$0xf]
    %v114 = vld [vmem:[%s3 + $0x100] sm:$0xf]
    %v115 = vld [vmem:[%s3 + $0x104] sm:$0xf]
    %v116 = vld [vmem:[%s3 + $0x108] sm:$0xf]
    %v117 = vld [vmem:[%s3 + $0x10c] sm:$0xf]
    %v118 = vld [vmem:[%s3 + $0x110] sm:$0xf]
    %v119 = vld [vmem:[%s3 + $0x114] sm:$0xf]
    %v120 = vld [vmem:[%s3 + $0x118] sm:$0xf]
    %v121 = vld [vmem:[%s3 + $0x11c] sm:$0xf]
    %v122 = vld [vmem:[%s3 + $0x120] sm:$0xf]
    %v123 = vld [vmem:[%s3 + $0x124] sm:$0xf]
    %v124 = vld [vmem:[%s3 + $0x128] sm:$0xf]
    %v125 = vld [vmem:[%s3 + $0x12c] sm:$0xf]
    %v126 = vld [vmem:[%s3 + $0x130] sm:$0xf]
    %v127 = vld [vmem:[%s3 + $0x134] sm:$0xf]
    %v128 = vld [vmem:[%s3 + $0x138] sm:$0xf]
    %v129 = vld [vmem:[%s3 + $0x13c] sm:$0xf]
    %v130 = vld [vmem:[%s3 + $0x140] sm:$0xf]
    %v131 = vld [vmem:[%s3 + $0x144] sm:$0xf]
    %v132 = vld [vmem:[%s3 + $0x148] sm:$0xf]
    %v133 = vld [vmem:[%s3 + $0x14c] sm:$0xf]
    %v134 = vld [vmem:[%s3 + $0x150] sm:$0xf]
    %v135 = vld [vmem:[%s3 + $0x154] sm:$0xf]
    %v136 = vld [vmem:[%s3 + $0x158] sm:$0xf]
    %v137 = vld [vmem:[%s3 + $0x15c] sm:$0xf]
    %v138 = vld [vmem:[%s3 + $0x160] sm:$0xf]
    %v139 = vld [vmem:[%s3 + $0x164] sm:$0xf]
    %v140 = vld [vmem:[%s3 + $0x168] sm:$0xf]
    %v141 = vld [vmem:[%s3 + $0x16c] sm:$0xf]
    %v142 = vld [vmem:[%s3 + $0x170] sm:$0xf]
    %v143 = vld [vmem:[%s3 + $0x174] sm:$0xf]
    %v144 = vld [vmem:[%s3 + $0x178] sm:$0xf]
    %v145 = vld [vmem:[%s3 + $0x17c] sm:$0xf]
    %v146 = vld [vmem:[%s3 + $0x180] sm:$0xf]
    %v147 = vld [vmem:[%s3 + $0x184] sm:$0xf]
    %v148 = vld [vmem:[%s3 + $0x188] sm:$0xf]
    %v149 = vld [vmem:[%s3 + $0x18c] sm:$0xf]
    %v150 = vld [vmem:[%s3 + $0x190] sm:$0xf]
    %v151 = vld [vmem:[%s3 + $0x194] sm:$0xf]
    %v152 = vld [vmem:[%s3 + $0x198] sm:$0xf]
    %v153 = vld [vmem:[%s3 + $0x19c] sm:$0xf]
    %v154 = vld [vmem:[%s3 + $0x1a0] sm:$0xf]
    %v155 = vld [vmem:[%s3 + $0x1a4] sm:$0xf]
    %v156 = vld [vmem:[%s3 + $0x1a8] sm:$0xf]
    %v157 = vld [vmem:[%s3 + $0x1ac] sm:$0xf]
    %v158 = vld [vmem:[%s3 + $0x1b0] sm:$0xf]
    %v159 = vld [vmem:[%s3 + $0x1b4] sm:$0xf]
    %v160 = vld [vmem:[%s3 + $0x1b8] sm:$0xf]
    %v161 = vld [vmem:[%s3 + $0x1bc] sm:$0xf]
    %v162 = vld [vmem:[%s4] sm:$0x1]
    %v164 = vperm.slane %v162, 0
    %v182 = vunpack.c.l.b16 %v34
    %v183 = vunpack.c.h.b16 %v34
    %v184 = vunpack.c.l.b16 %v35
    %v185 = vunpack.c.h.b16 %v35
    %v186 = vunpack.c.l.b16 %v36
    %v187 = vunpack.c.h.b16 %v36
    %v188 = vunpack.c.l.b16 %v37
    %v189 = vunpack.c.l.b16 %v38
    %v190 = vunpack.c.h.b16 %v38
    %v191 = vunpack.c.l.b16 %v39
    %v192 = vunpack.c.h.b16 %v39
    %v193 = vunpack.c.l.b16 %v40
    %v194 = vunpack.c.h.b16 %v40
    %v195 = vunpack.c.l.b16 %v41
    %v196 = vunpack.c.l.b16 %v42
    %v197 = vunpack.c.h.b16 %v42
    %v198 = vunpack.c.l.b16 %v43
    %v199 = vunpack.c.h.b16 %v43
    %v200 = vunpack.c.l.b16 %v44
    %v201 = vunpack.c.h.b16 %v44
    %v202 = vunpack.c.l.b16 %v45
    %v203 = vunpack.c.l.b16 %v46
    %v204 = vunpack.c.h.b16 %v46
    %v205 = vunpack.c.l.b16 %v47
    %v206 = vunpack.c.h.b16 %v47
    %v207 = vunpack.c.l.b16 %v48
    %v208 = vunpack.c.h.b16 %v48
    %v209 = vunpack.c.l.b16 %v49
    %v210 = vpack.c.b16 %v189, %v182
    %v211 = vpack.c.b16 %v190, %v183
    %v212 = vpack.c.b16 %v191, %v184
    %v213 = vpack.c.b16 %v192, %v185
    %v214 = vpack.c.b16 %v193, %v186
    %v215 = vpack.c.b16 %v194, %v187
    %v216 = vpack.c.b16 %v195, %v188
    %v217 = vpack.c.b16 %v203, %v196
    %v218 = vpack.c.b16 %v204, %v197
    %v219 = vpack.c.b16 %v205, %v198
    %v220 = vpack.c.b16 %v206, %v199
    %v221 = vpack.c.b16 %v207, %v200
    %v222 = vpack.c.b16 %v208, %v201
    %v223 = vpack.c.b16 %v209, %v202
    %v350 = vunpack.c.l.b16 %v50
    %v351 = vunpack.c.l.b16 %v51
    %v352 = vunpack.c.l.b16 %v52
    %v353 = vunpack.c.l.b16 %v53
    %v354 = vunpack.c.l.b16 %v54
    %v355 = vunpack.c.l.b16 %v55
    %v356 = vunpack.c.l.b16 %v56
    %v357 = vunpack.c.l.b16 %v57
    %v358 = vunpack.c.l.b16 %v58
    %v359 = vunpack.c.l.b16 %v59
    %v360 = vunpack.c.l.b16 %v60
    %v361 = vunpack.c.l.b16 %v61
    %v362 = vunpack.c.l.b16 %v62
    %v363 = vunpack.c.l.b16 %v63
    %v364 = vunpack.c.l.b16 %v64
    %v365 = vunpack.c.l.b16 %v65
    %v366 = vunpack.c.l.b16 %v66
    %v367 = vunpack.c.l.b16 %v67
    %v368 = vunpack.c.l.b16 %v68
    %v369 = vunpack.c.l.b16 %v69
    %v370 = vunpack.c.l.b16 %v70
    %v371 = vunpack.c.l.b16 %v71
    %v372 = vunpack.c.l.b16 %v72
    %v373 = vunpack.c.l.b16 %v73
    %v374 = vunpack.c.l.b16 %v74
    %v375 = vunpack.c.l.b16 %v75
    %v376 = vunpack.c.l.b16 %v76
    %v377 = vunpack.c.l.b16 %v77
    %v378 = vunpack.c.l.b16 %v78
    %v379 = vunpack.c.l.b16 %v79
    %v380 = vunpack.c.l.b16 %v80
    %v381 = vunpack.c.l.b16 %v81
    %v382 = vunpack.c.l.b16 %v82
    %v383 = vunpack.c.l.b16 %v83
    %v384 = vunpack.c.l.b16 %v84
    %v385 = vunpack.c.l.b16 %v85
    %v386 = vunpack.c.l.b16 %v86
    %v387 = vunpack.c.l.b16 %v87
    %v388 = vunpack.c.l.b16 %v88
    %v389 = vunpack.c.l.b16 %v89
    %v390 = vunpack.c.l.b16 %v90
    %v391 = vunpack.c.l.b16 %v91
    %v392 = vunpack.c.l.b16 %v92
    %v393 = vunpack.c.l.b16 %v93
    %v394 = vunpack.c.l.b16 %v94
    %v395 = vunpack.c.l.b16 %v95
    %v396 = vunpack.c.l.b16 %v96
    %v397 = vunpack.c.l.b16 %v97
    %v398 = vunpack.c.l.b16 %v98
    %v399 = vunpack.c.l.b16 %v99
    %v400 = vunpack.c.l.b16 %v100
    %v401 = vunpack.c.l.b16 %v101
    %v402 = vunpack.c.l.b16 %v102
    %v403 = vunpack.c.l.b16 %v103
    %v404 = vunpack.c.l.b16 %v104
    %v405 = vunpack.c.l.b16 %v105
    %v406 = vunpack.c.l.b16 %v106
    %v407 = vunpack.c.l.b16 %v107
    %v408 = vunpack.c.l.b16 %v108
    %v409 = vunpack.c.l.b16 %v109
    %v410 = vunpack.c.l.b16 %v110
    %v411 = vunpack.c.l.b16 %v111
    %v412 = vunpack.c.l.b16 %v112
    %v413 = vunpack.c.l.b16 %v113
    %v414 = vunpack.c.l.b16 %v114
    %v415 = vunpack.c.l.b16 %v115
    %v416 = vunpack.c.l.b16 %v116
    %v417 = vunpack.c.l.b16 %v117
    %v418 = vunpack.c.l.b16 %v118
    %v419 = vunpack.c.l.b16 %v119
    %v420 = vunpack.c.l.b16 %v120
    %v421 = vunpack.c.l.b16 %v121
    %v422 = vunpack.c.l.b16 %v122
    %v423 = vunpack.c.l.b16 %v123
    %v424 = vunpack.c.l.b16 %v124
    %v425 = vunpack.c.l.b16 %v125
    %v426 = vunpack.c.l.b16 %v126
    %v427 = vunpack.c.l.b16 %v127
    %v428 = vunpack.c.l.b16 %v128
    %v429 = vunpack.c.l.b16 %v129
    %v430 = vunpack.c.l.b16 %v130
    %v431 = vunpack.c.l.b16 %v131
    %v432 = vunpack.c.l.b16 %v132
    %v433 = vunpack.c.l.b16 %v133
    %v434 = vunpack.c.l.b16 %v134
    %v435 = vunpack.c.l.b16 %v135
    %v436 = vunpack.c.l.b16 %v136
    %v437 = vunpack.c.l.b16 %v137
    %v438 = vunpack.c.l.b16 %v138
    %v439 = vunpack.c.l.b16 %v139
    %v440 = vunpack.c.l.b16 %v140
    %v441 = vunpack.c.l.b16 %v141
    %v442 = vunpack.c.l.b16 %v142
    %v443 = vunpack.c.l.b16 %v143
    %v444 = vunpack.c.l.b16 %v144
    %v445 = vunpack.c.l.b16 %v145
    %v446 = vunpack.c.l.b16 %v146
    %v447 = vunpack.c.l.b16 %v147
    %v448 = vunpack.c.l.b16 %v148
    %v449 = vunpack.c.l.b16 %v149
    %v450 = vunpack.c.l.b16 %v150
    %v451 = vunpack.c.l.b16 %v151
    %v452 = vunpack.c.l.b16 %v152
    %v453 = vunpack.c.l.b16 %v153
    %v454 = vunpack.c.l.b16 %v154
    %v455 = vunpack.c.l.b16 %v155
    %v456 = vunpack.c.l.b16 %v156
    %v457 = vunpack.c.l.b16 %v157
    %v458 = vunpack.c.l.b16 %v158
    %v459 = vunpack.c.l.b16 %v159
    %v460 = vunpack.c.l.b16 %v160
    %v461 = vunpack.c.l.b16 %v161
    %v462 = vpack.c.b16 %v351, %v350
    %v463 = vpack.c.b16 %v353, %v352
    %v464 = vpack.c.b16 %v355, %v354
    %v465 = vpack.c.b16 %v357, %v356
    %v466 = vpack.c.b16 %v359, %v358
    %v467 = vpack.c.b16 %v361, %v360
    %v468 = vpack.c.b16 %v363, %v362
    %v469 = vpack.c.b16 %v365, %v364
    %v470 = vpack.c.b16 %v367, %v366
    %v471 = vpack.c.b16 %v369, %v368
    %v472 = vpack.c.b16 %v371, %v370
    %v473 = vpack.c.b16 %v373, %v372
    %v474 = vpack.c.b16 %v375, %v374
    %v475 = vpack.c.b16 %v377, %v376
    %v476 = vpack.c.b16 %v379, %v378
    %v477 = vpack.c.b16 %v381, %v380
    %v478 = vpack.c.b16 %v383, %v382
    %v479 = vpack.c.b16 %v385, %v384
    %v480 = vpack.c.b16 %v387, %v386
    %v481 = vpack.c.b16 %v389, %v388
    %v482 = vpack.c.b16 %v391, %v390
    %v483 = vpack.c.b16 %v393, %v392
    %v484 = vpack.c.b16 %v395, %v394
    %v485 = vpack.c.b16 %v397, %v396
    %v486 = vpack.c.b16 %v399, %v398
    %v487 = vpack.c.b16 %v401, %v400
    %v488 = vpack.c.b16 %v403, %v402
    %v489 = vpack.c.b16 %v405, %v404
    %v490 = vpack.c.b16 %v407, %v406
    %v491 = vpack.c.b16 %v409, %v408
    %v492 = vpack.c.b16 %v411, %v410
    %v493 = vpack.c.b16 %v413, %v412
    %v494 = vpack.c.b16 %v415, %v414
    %v495 = vpack.c.b16 %v417, %v416
    %v496 = vpack.c.b16 %v419, %v418
    %v497 = vpack.c.b16 %v421, %v420
    %v498 = vpack.c.b16 %v423, %v422
    %v499 = vpack.c.b16 %v425, %v424
    %v500 = vpack.c.b16 %v427, %v426
    %v501 = vpack.c.b16 %v429, %v428
    %v502 = vpack.c.b16 %v431, %v430
    %v503 = vpack.c.b16 %v433, %v432
    %v504 = vpack.c.b16 %v435, %v434
    %v505 = vpack.c.b16 %v437, %v436
    %v506 = vpack.c.b16 %v439, %v438
    %v507 = vpack.c.b16 %v441, %v440
    %v508 = vpack.c.b16 %v443, %v442
    %v509 = vpack.c.b16 %v445, %v444
    %v510 = vpack.c.b16 %v447, %v446
    %v511 = vpack.c.b16 %v449, %v448
    %v512 = vpack.c.b16 %v451, %v450
    %v513 = vpack.c.b16 %v453, %v452
    %v514 = vpack.c.b16 %v455, %v454
    %v515 = vpack.c.b16 %v457, %v456
    %v516 = vpack.c.b16 %v459, %v458
    %v517 = vpack.c.b16 %v461, %v460
    %574 = vmatpush.bf16.msra.mxu0 %v469
    %575 = vmatpush.bf16.msra.mxu0 %v468
    %576 = vmatpush.bf16.msra.mxu0 %v467
    %577 = vmatpush.bf16.msra.mxu0 %v466
    %578 = vmatpush.bf16.msra.mxu0 %v465
    %579 = vmatpush.bf16.msra.mxu0 %v464
    %580 = vmatpush.bf16.msra.mxu0 %v463
    %581 = vmatpush.bf16.msra.mxu0 %v462
    %582 = vmatmul.bf16.gmra.mxu0 %v210
    %v583 = vpop.f32.mrf.mxu0
    %v584 = vadd.f32 %v164, %v583
    %v585 = vpop.f32.mrf.mxu0
    %v586 = vadd.f32 %v164, %v585
    %587 = vmatmul.bf16.gmra.mxu0 %v217
    %v588 = vpop.f32.mrf.mxu0
    %v589 = vadd.f32 %v164, %v588
    %v590 = vpop.f32.mrf.mxu0
    %v591 = vadd.f32 %v164, %v590
    %592 = vdwg.mxu0
    %593 = vmatpush.bf16.msra.mxu0 %v477
    %594 = vmatpush.bf16.msra.mxu0 %v476
    %595 = vmatpush.bf16.msra.mxu0 %v475
    %596 = vmatpush.bf16.msra.mxu0 %v474
    %597 = vmatpush.bf16.msra.mxu0 %v473
    %598 = vmatpush.bf16.msra.mxu0 %v472
    %599 = vmatpush.bf16.msra.mxu0 %v471
    %600 = vmatpush.bf16.msra.mxu0 %v470
    %601 = vmatmul.bf16.gmra.mxu0 %v211
    %v602 = vpop.f32.mrf.mxu0
    %v603 = vadd.f32 %v584, %v602
    %v604 = vpop.f32.mrf.mxu0
    %v605 = vadd.f32 %v586, %v604
    %606 = vmatmul.bf16.gmra.mxu0 %v218
    %v607 = vpop.f32.mrf.mxu0
    %v608 = vadd.f32 %v589, %v607
    %v609 = vpop.f32.mrf.mxu0
    %v610 = vadd.f32 %v591, %v609
    %611 = vdwg.mxu0
    %612 = vmatpush.bf16.msra.mxu0 %v485
    %613 = vmatpush.bf16.msra.mxu0 %v484
    %614 = vmatpush.bf16.msra.mxu0 %v483
    %615 = vmatpush.bf16.msra.mxu0 %v482
    %616 = vmatpush.bf16.msra.mxu0 %v481
    %617 = vmatpush.bf16.msra.mxu0 %v480
    %618 = vmatpush.bf16.msra.mxu0 %v479
    %619 = vmatpush.bf16.msra.mxu0 %v478
    %620 = vmatmul.bf16.gmra.mxu0 %v212
    %v621 = vpop.f32.mrf.mxu0
    %v622 = vadd.f32 %v603, %v621
    %v623 = vpop.f32.mrf.mxu0
    %v624 = vadd.f32 %v605, %v623
    %625 = vmatmul.bf16.gmra.mxu0 %v219
    %v626 = vpop.f32.mrf.mxu0
    %v627 = vadd.f32 %v608, %v626
    %v628 = vpop.f32.mrf.mxu0
    %v629 = vadd.f32 %v610, %v628
    %630 = vdwg.mxu0
    %631 = vmatpush.bf16.msra.mxu0 %v493
    %632 = vmatpush.bf16.msra.mxu0 %v492
    %633 = vmatpush.bf16.msra.mxu0 %v491
    %634 = vmatpush.bf16.msra.mxu0 %v490
    %635 = vmatpush.bf16.msra.mxu0 %v489
    %636 = vmatpush.bf16.msra.mxu0 %v488
    %637 = vmatpush.bf16.msra.mxu0 %v487
    %638 = vmatpush.bf16.msra.mxu0 %v486
    %639 = vmatmul.bf16.gmra.mxu0 %v213
    %v640 = vpop.f32.mrf.mxu0
    %v641 = vadd.f32 %v622, %v640
    %v642 = vpop.f32.mrf.mxu0
    %v643 = vadd.f32 %v624, %v642
    %644 = vmatmul.bf16.gmra.mxu0 %v220
    %v645 = vpop.f32.mrf.mxu0
    %v646 = vadd.f32 %v627, %v645
    %v647 = vpop.f32.mrf.mxu0
    %v648 = vadd.f32 %v629, %v647
    %649 = vdwg.mxu0
    %650 = vmatpush.bf16.msra.mxu0 %v501
    %651 = vmatpush.bf16.msra.mxu0 %v500
    %652 = vmatpush.bf16.msra.mxu0 %v499
    %653 = vmatpush.bf16.msra.mxu0 %v498
    %654 = vmatpush.bf16.msra.mxu0 %v497
    %655 = vmatpush.bf16.msra.mxu0 %v496
    %656 = vmatpush.bf16.msra.mxu0 %v495
    %657 = vmatpush.bf16.msra.mxu0 %v494
    %658 = vmatmul.bf16.gmra.mxu0 %v214
    %v659 = vpop.f32.mrf.mxu0
    %v660 = vadd.f32 %v641, %v659
    %v661 = vpop.f32.mrf.mxu0
    %v662 = vadd.f32 %v643, %v661
    %663 = vmatmul.bf16.gmra.mxu0 %v221
    %v664 = vpop.f32.mrf.mxu0
    %v665 = vadd.f32 %v646, %v664
    %v666 = vpop.f32.mrf.mxu0
    %v667 = vadd.f32 %v648, %v666
    %668 = vdwg.mxu0
    %669 = vmatpush.bf16.msra.mxu0 %v509
    %670 = vmatpush.bf16.msra.mxu0 %v508
    %671 = vmatpush.bf16.msra.mxu0 %v507
    %672 = vmatpush.bf16.msra.mxu0 %v506
    %673 = vmatpush.bf16.msra.mxu0 %v505
    %674 = vmatpush.bf16.msra.mxu0 %v504
    %675 = vmatpush.bf16.msra.mxu0 %v503
    %676 = vmatpush.bf16.msra.mxu0 %v502
    %677 = vmatmul.bf16.gmra.mxu0 %v215
    %v678 = vpop.f32.mrf.mxu0
    %v679 = vadd.f32 %v660, %v678
    %v680 = vpop.f32.mrf.mxu0
    %v681 = vadd.f32 %v662, %v680
    %682 = vmatmul.bf16.gmra.mxu0 %v222
    %v683 = vpop.f32.mrf.mxu0
    %v684 = vadd.f32 %v665, %v683
    %v685 = vpop.f32.mrf.mxu0
    %v686 = vadd.f32 %v667, %v685
    %687 = vdwg.mxu0
    %688 = vmatpush.bf16.msra.mxu0 %v517
    %689 = vmatpush.bf16.msra.mxu0 %v516
    %690 = vmatpush.bf16.msra.mxu0 %v515
    %691 = vmatpush.bf16.msra.mxu0 %v514
    %692 = vmatpush.bf16.msra.mxu0 %v513
    %693 = vmatpush.bf16.msra.mxu0 %v512
    %694 = vmatpush.bf16.msra.mxu0 %v511
    %695 = vmatpush.bf16.msra.mxu0 %v510
    %696 = vmatmul.bf16.gmra.mxu0 %v216
    %v697 = vpop.f32.mrf.mxu0
    %v698 = vadd.f32 %v679, %v697
    %v699 = vpop.f32.mrf.mxu0
    %v700 = vadd.f32 %v681, %v699
    %701 = vmatmul.bf16.gmra.mxu0 %v223
    %v702 = vpop.f32.mrf.mxu0
    %v703 = vadd.f32 %v684, %v702
    %v704 = vpop.f32.mrf.mxu0
    %v705 = vadd.f32 %v686, %v704
    %706 = vdwg.mxu0
    %v707 = vld [vmem:[%s2] sm:$0xff]
    %v708 = vld [vmem:[%s2 + $0x8] sm:$0xff]
    %v709 = vld [vmem:[%s2 + $0x10] sm:$0xff]
    %v710 = vld [vmem:[%s2 + $0x18] sm:$0xf]
    %v711 = vld [vmem:[%s2 + $0x1c] sm:$0xff]
    %v712 = vld [vmem:[%s2 + $0x24] sm:$0xff]
    %v713 = vld [vmem:[%s2 + $0x2c] sm:$0xff]
    %v714 = vld [vmem:[%s2 + $0x34] sm:$0xf]
    %v715 = vld [vmem:[%s2 + $0x38] sm:$0xff]
    %v716 = vld [vmem:[%s2 + $0x40] sm:$0xff]
    %v717 = vld [vmem:[%s2 + $0x48] sm:$0xff]
    %v718 = vld [vmem:[%s2 + $0x50] sm:$0xf]
    %v719 = vld [vmem:[%s2 + $0x54] sm:$0xff]
    %v720 = vld [vmem:[%s2 + $0x5c] sm:$0xff]
    %v721 = vld [vmem:[%s2 + $0x64] sm:$0xff]
    %v722 = vld [vmem:[%s2 + $0x6c] sm:$0xf]
    %v723 = vld [vmem:[%s5] sm:$0xf]
    %v724 = vld [vmem:[%s5 + $0x4] sm:$0xf]
    %v725 = vld [vmem:[%s5 + $0x8] sm:$0xf]
    %v726 = vld [vmem:[%s5 + $0xc] sm:$0xf]
    %v727 = vld [vmem:[%s5 + $0x10] sm:$0xf]
    %v728 = vld [vmem:[%s5 + $0x14] sm:$0xf]
    %v729 = vld [vmem:[%s5 + $0x18] sm:$0xf]
    %v730 = vld [vmem:[%s5 + $0x1c] sm:$0xf]
    %v731 = vld [vmem:[%s5 + $0x20] sm:$0xf]
    %v732 = vld [vmem:[%s5 + $0x24] sm:$0xf]
    %v733 = vld [vmem:[%s5 + $0x28] sm:$0xf]
    %v734 = vld [vmem:[%s5 + $0x2c] sm:$0xf]
    %v735 = vld [vmem:[%s5 + $0x30] sm:$0xf]
    %v736 = vld [vmem:[%s5 + $0x34] sm:$0xf]
    %v737 = vld [vmem:[%s5 + $0x38] sm:$0xf]
    %v738 = vld [vmem:[%s5 + $0x3c] sm:$0xf]
    %v739 = vld [vmem:[%s5 + $0x40] sm:$0xf]
    %v740 = vld [vmem:[%s5 + $0x44] sm:$0xf]
    %v741 = vld [vmem:[%s5 + $0x48] sm:$0xf]
    %v742 = vld [vmem:[%s5 + $0x4c] sm:$0xf]
    %v743 = vld [vmem:[%s5 + $0x50] sm:$0xf]
    %v744 = vld [vmem:[%s5 + $0x54] sm:$0xf]
    %v745 = vld [vmem:[%s5 + $0x58] sm:$0xf]
    %v746 = vld [vmem:[%s5 + $0x5c] sm:$0xf]
    %v747 = vld [vmem:[%s5 + $0x60] sm:$0xf]
    %v748 = vld [vmem:[%s5 + $0x64] sm:$0xf]
    %v749 = vld [vmem:[%s5 + $0x68] sm:$0xf]
    %v750 = vld [vmem:[%s5 + $0x6c] sm:$0xf]
    %v751 = vld [vmem:[%s5 + $0x70] sm:$0xf]
    %v752 = vld [vmem:[%s5 + $0x74] sm:$0xf]
    %v753 = vld [vmem:[%s5 + $0x78] sm:$0xf]
    %v754 = vld [vmem:[%s5 + $0x7c] sm:$0xf]
    %v755 = vld [vmem:[%s5 + $0x80] sm:$0xf]
    %v756 = vld [vmem:[%s5 + $0x84] sm:$0xf]
    %v757 = vld [vmem:[%s5 + $0x88] sm:$0xf]
    %v758 = vld [vmem:[%s5 + $0x8c] sm:$0xf]
    %v759 = vld [vmem:[%s5 + $0x90] sm:$0xf]
    %v760 = vld [vmem:[%s5 + $0x94] sm:$0xf]
    %v761 = vld [vmem:[%s5 + $0x98] sm:$0xf]
    %v762 = vld [vmem:[%s5 + $0x9c] sm:$0xf]
    %v763 = vld [vmem:[%s5 + $0xa0] sm:$0xf]
    %v764 = vld [vmem:[%s5 + $0xa4] sm:$0xf]
    %v765 = vld [vmem:[%s5 + $0xa8] sm:$0xf]
    %v766 = vld [vmem:[%s5 + $0xac] sm:$0xf]
    %v767 = vld [vmem:[%s5 + $0xb0] sm:$0xf]
    %v768 = vld [vmem:[%s5 + $0xb4] sm:$0xf]
    %v769 = vld [vmem:[%s5 + $0xb8] sm:$0xf]
    %v770 = vld [vmem:[%s5 + $0xbc] sm:$0xf]
    %v771 = vld [vmem:[%s5 + $0xc0] sm:$0xf]
    %v772 = vld [vmem:[%s5 + $0xc4] sm:$0xf]
    %v773 = vld [vmem:[%s5 + $0xc8] sm:$0xf]
    %v774 = vld [vmem:[%s5 + $0xcc] sm:$0xf]
    %v775 = vld [vmem:[%s5 + $0xd0] sm:$0xf]
    %v776 = vld [vmem:[%s5 + $0xd4] sm:$0xf]
    %v777 = vld [vmem:[%s5 + $0xd8] sm:$0xf]
    %v778 = vld [vmem:[%s5 + $0xdc] sm:$0xf]
    %v779 = vld [vmem:[%s5 + $0xe0] sm:$0xf]
    %v780 = vld [vmem:[%s5 + $0xe4] sm:$0xf]
    %v781 = vld [vmem:[%s5 + $0xe8] sm:$0xf]
    %v782 = vld [vmem:[%s5 + $0xec] sm:$0xf]
    %v783 = vld [vmem:[%s5 + $0xf0] sm:$0xf]
    %v784 = vld [vmem:[%s5 + $0xf4] sm:$0xf]
    %v785 = vld [vmem:[%s5 + $0xf8] sm:$0xf]
    %v786 = vld [vmem:[%s5 + $0xfc] sm:$0xf]
    %v787 = vld [vmem:[%s5 + $0x100] sm:$0xf]
    %v788 = vld [vmem:[%s5 + $0x104] sm:$0xf]
    %v789 = vld [vmem:[%s5 + $0x108] sm:$0xf]
    %v790 = vld [vmem:[%s5 + $0x10c] sm:$0xf]
    %v791 = vld [vmem:[%s5 + $0x110] sm:$0xf]
    %v792 = vld [vmem:[%s5 + $0x114] sm:$0xf]
    %v793 = vld [vmem:[%s5 + $0x118] sm:$0xf]
    %v794 = vld [vmem:[%s5 + $0x11c] sm:$0xf]
    %v795 = vld [vmem:[%s5 + $0x120] sm:$0xf]
    %v796 = vld [vmem:[%s5 + $0x124] sm:$0xf]
    %v797 = vld [vmem:[%s5 + $0x128] sm:$0xf]
    %v798 = vld [vmem:[%s5 + $0x12c] sm:$0xf]
    %v799 = vld [vmem:[%s5 + $0x130] sm:$0xf]
    %v800 = vld [vmem:[%s5 + $0x134] sm:$0xf]
    %v801 = vld [vmem:[%s5 + $0x138] sm:$0xf]
    %v802 = vld [vmem:[%s5 + $0x13c] sm:$0xf]
    %v803 = vld [vmem:[%s5 + $0x140] sm:$0xf]
    %v804 = vld [vmem:[%s5 + $0x144] sm:$0xf]
    %v805 = vld [vmem:[%s5 + $0x148] sm:$0xf]
    %v806 = vld [vmem:[%s5 + $0x14c] sm:$0xf]
    %v807 = vld [vmem:[%s5 + $0x150] sm:$0xf]
    %v808 = vld [vmem:[%s5 + $0x154] sm:$0xf]
    %v809 = vld [vmem:[%s5 + $0x158] sm:$0xf]
    %v810 = vld [vmem:[%s5 + $0x15c] sm:$0xf]
    %v811 = vld [vmem:[%s5 + $0x160] sm:$0xf]
    %v812 = vld [vmem:[%s5 + $0x164] sm:$0xf]
    %v813 = vld [vmem:[%s5 + $0x168] sm:$0xf]
    %v814 = vld [vmem:[%s5 + $0x16c] sm:$0xf]
    %v815 = vld [vmem:[%s5 + $0x170] sm:$0xf]
    %v816 = vld [vmem:[%s5 + $0x174] sm:$0xf]
    %v817 = vld [vmem:[%s5 + $0x178] sm:$0xf]
    %v818 = vld [vmem:[%s5 + $0x17c] sm:$0xf]
    %v819 = vld [vmem:[%s5 + $0x180] sm:$0xf]
    %v820 = vld [vmem:[%s5 + $0x184] sm:$0xf]
    %v821 = vld [vmem:[%s5 + $0x188] sm:$0xf]
    %v822 = vld [vmem:[%s5 + $0x18c] sm:$0xf]
    %v823 = vld [vmem:[%s5 + $0x190] sm:$0xf]
    %v824 = vld [vmem:[%s5 + $0x194] sm:$0xf]
    %v825 = vld [vmem:[%s5 + $0x198] sm:$0xf]
    %v826 = vld [vmem:[%s5 + $0x19c] sm:$0xf]
    %v827 = vld [vmem:[%s5 + $0x1a0] sm:$0xf]
    %v828 = vld [vmem:[%s5 + $0x1a4] sm:$0xf]
    %v829 = vld [vmem:[%s5 + $0x1a8] sm:$0xf]
    %v830 = vld [vmem:[%s5 + $0x1ac] sm:$0xf]
    %v831 = vld [vmem:[%s5 + $0x1b0] sm:$0xf]
    %v832 = vld [vmem:[%s5 + $0x1b4] sm:$0xf]
    %v833 = vld [vmem:[%s5 + $0x1b8] sm:$0xf]
    %v834 = vld [vmem:[%s5 + $0x1bc] sm:$0xf]
    %v835 = vld [vmem:[%s6] sm:$0x1]
    %v837 = vperm.slane %v835, 0
    %v855 = vunpack.c.l.b16 %v707
    %v856 = vunpack.c.h.b16 %v707
    %v857 = vunpack.c.l.b16 %v708
    %v858 = vunpack.c.h.b16 %v708
    %v859 = vunpack.c.l.b16 %v709
    %v860 = vunpack.c.h.b16 %v709
    %v861 = vunpack.c.l.b16 %v710
    %v862 = vunpack.c.l.b16 %v711
    %v863 = vunpack.c.h.b16 %v711
    %v864 = vunpack.c.l.b16 %v712
    %v865 = vunpack.c.h.b16 %v712
    %v866 = vunpack.c.l.b16 %v713
    %v867 = vunpack.c.h.b16 %v713
    %v868 = vunpack.c.l.b16 %v714
    %v869 = vunpack.c.l.b16 %v715
    %v870 = vunpack.c.h.b16 %v715
    %v871 = vunpack.c.l.b16 %v716
    %v872 = vunpack.c.h.b16 %v716
    %v873 = vunpack.c.l.b16 %v717
    %v874 = vunpack.c.h.b16 %v717
    %v875 = vunpack.c.l.b16 %v718
    %v876 = vunpack.c.l.b16 %v719
    %v877 = vunpack.c.h.b16 %v719
    %v878 = vunpack.c.l.b16 %v720
    %v879 = vunpack.c.h.b16 %v720
    %v880 = vunpack.c.l.b16 %v721
    %v881 = vunpack.c.h.b16 %v721
    %v882 = vunpack.c.l.b16 %v722
    %v883 = vpack.c.b16 %v862, %v855
    %v884 = vpack.c.b16 %v863, %v856
    %v885 = vpack.c.b16 %v864, %v857
    %v886 = vpack.c.b16 %v865, %v858
    %v887 = vpack.c.b16 %v866, %v859
    %v888 = vpack.c.b16 %v867, %v860
    %v889 = vpack.c.b16 %v868, %v861
    %v890 = vpack.c.b16 %v876, %v869
    %v891 = vpack.c.b16 %v877, %v870
    %v892 = vpack.c.b16 %v878, %v871
    %v893 = vpack.c.b16 %v879, %v872
    %v894 = vpack.c.b16 %v880, %v873
    %v895 = vpack.c.b16 %v881, %v874
    %v896 = vpack.c.b16 %v882, %v875
    %v1023 = vunpack.c.l.b16 %v723
    %v1024 = vunpack.c.l.b16 %v724
    %v1025 = vunpack.c.l.b16 %v725
    %v1026 = vunpack.c.l.b16 %v726
    %v1027 = vunpack.c.l.b16 %v727
    %v1028 = vunpack.c.l.b16 %v728
    %v1029 = vunpack.c.l.b16 %v729
    %v1030 = vunpack.c.l.b16 %v730
    %v1031 = vunpack.c.l.b16 %v731
    %v1032 = vunpack.c.l.b16 %v732
    %v1033 = vunpack.c.l.b16 %v733
    %v1034 = vunpack.c.l.b16 %v734
    %v1035 = vunpack.c.l.b16 %v735
    %v1036 = vunpack.c.l.b16 %v736
    %v1037 = vunpack.c.l.b16 %v737
    %v1038 = vunpack.c.l.b16 %v738
    %v1039 = vunpack.c.l.b16 %v739
    %v1040 = vunpack.c.l.b16 %v740
    %v1041 = vunpack.c.l.b16 %v741
    %v1042 = vunpack.c.l.b16 %v742
    %v1043 = vunpack.c.l.b16 %v743
    %v1044 = vunpack.c.l.b16 %v744
    %v1045 = vunpack.c.l.b16 %v745
    %v1046 = vunpack.c.l.b16 %v746
    %v1047 = vunpack.c.l.b16 %v747
    %v1048 = vunpack.c.l.b16 %v748
    %v1049 = vunpack.c.l.b16 %v749
    %v1050 = vunpack.c.l.b16 %v750
    %v1051 = vunpack.c.l.b16 %v751
    %v1052 = vunpack.c.l.b16 %v752
    %v1053 = vunpack.c.l.b16 %v753
    %v1054 = vunpack.c.l.b16 %v754
    %v1055 = vunpack.c.l.b16 %v755
    %v1056 = vunpack.c.l.b16 %v756
    %v1057 = vunpack.c.l.b16 %v757
    %v1058 = vunpack.c.l.b16 %v758
    %v1059 = vunpack.c.l.b16 %v759
    %v1060 = vunpack.c.l.b16 %v760
    %v1061 = vunpack.c.l.b16 %v761
    %v1062 = vunpack.c.l.b16 %v762
    %v1063 = vunpack.c.l.b16 %v763
    %v1064 = vunpack.c.l.b16 %v764
    %v1065 = vunpack.c.l.b16 %v765
    %v1066 = vunpack.c.l.b16 %v766
    %v1067 = vunpack.c.l.b16 %v767
    %v1068 = vunpack.c.l.b16 %v768
    %v1069 = vunpack.c.l.b16 %v769
    %v1070 = vunpack.c.l.b16 %v770
    %v1071 = vunpack.c.l.b16 %v771
    %v1072 = vunpack.c.l.b16 %v772
    %v1073 = vunpack.c.l.b16 %v773
    %v1074 = vunpack.c.l.b16 %v774
    %v1075 = vunpack.c.l.b16 %v775
    %v1076 = vunpack.c.l.b16 %v776
    %v1077 = vunpack.c.l.b16 %v777
    %v1078 = vunpack.c.l.b16 %v778
    %v1079 = vunpack.c.l.b16 %v779
    %v1080 = vunpack.c.l.b16 %v780
    %v1081 = vunpack.c.l.b16 %v781
    %v1082 = vunpack.c.l.b16 %v782
    %v1083 = vunpack.c.l.b16 %v783
    %v1084 = vunpack.c.l.b16 %v784
    %v1085 = vunpack.c.l.b16 %v785
    %v1086 = vunpack.c.l.b16 %v786
    %v1087 = vunpack.c.l.b16 %v787
    %v1088 = vunpack.c.l.b16 %v788
    %v1089 = vunpack.c.l.b16 %v789
    %v1090 = vunpack.c.l.b16 %v790
    %v1091 = vunpack.c.l.b16 %v791
    %v1092 = vunpack.c.l.b16 %v792
    %v1093 = vunpack.c.l.b16 %v793
    %v1094 = vunpack.c.l.b16 %v794
    %v1095 = vunpack.c.l.b16 %v795
    %v1096 = vunpack.c.l.b16 %v796
    %v1097 = vunpack.c.l.b16 %v797
    %v1098 = vunpack.c.l.b16 %v798
    %v1099 = vunpack.c.l.b16 %v799
    %v1100 = vunpack.c.l.b16 %v800
    %v1101 = vunpack.c.l.b16 %v801
    %v1102 = vunpack.c.l.b16 %v802
    %v1103 = vunpack.c.l.b16 %v803
    %v1104 = vunpack.c.l.b16 %v804
    %v1105 = vunpack.c.l.b16 %v805
    %v1106 = vunpack.c.l.b16 %v806
    %v1107 = vunpack.c.l.b16 %v807
    %v1108 = vunpack.c.l.b16 %v808
    %v1109 = vunpack.c.l.b16 %v809
    %v1110 = vunpack.c.l.b16 %v810
    %v1111 = vunpack.c.l.b16 %v811
    %v1112 = vunpack.c.l.b16 %v812
    %v1113 = vunpack.c.l.b16 %v813
    %v1114 = vunpack.c.l.b16 %v814
    %v1115 = vunpack.c.l.b16 %v815
    %v1116 = vunpack.c.l.b16 %v816
    %v1117 = vunpack.c.l.b16 %v817
    %v1118 = vunpack.c.l.b16 %v818
    %v1119 = vunpack.c.l.b16 %v819
    %v1120 = vunpack.c.l.b16 %v820
    %v1121 = vunpack.c.l.b16 %v821
    %v1122 = vunpack.c.l.b16 %v822
    %v1123 = vunpack.c.l.b16 %v823
    %v1124 = vunpack.c.l.b16 %v824
    %v1125 = vunpack.c.l.b16 %v825
    %v1126 = vunpack.c.l.b16 %v826
    %v1127 = vunpack.c.l.b16 %v827
    %v1128 = vunpack.c.l.b16 %v828
    %v1129 = vunpack.c.l.b16 %v829
    %v1130 = vunpack.c.l.b16 %v830
    %v1131 = vunpack.c.l.b16 %v831
    %v1132 = vunpack.c.l.b16 %v832
    %v1133 = vunpack.c.l.b16 %v833
    %v1134 = vunpack.c.l.b16 %v834
    %v1135 = vpack.c.b16 %v1024, %v1023
    %v1136 = vpack.c.b16 %v1026, %v1025
    %v1137 = vpack.c.b16 %v1028, %v1027
    %v1138 = vpack.c.b16 %v1030, %v1029
    %v1139 = vpack.c.b16 %v1032, %v1031
    %v1140 = vpack.c.b16 %v1034, %v1033
    %v1141 = vpack.c.b16 %v1036, %v1035
    %v1142 = vpack.c.b16 %v1038, %v1037
    %v1143 = vpack.c.b16 %v1040, %v1039
    %v1144 = vpack.c.b16 %v1042, %v1041
    %v1145 = vpack.c.b16 %v1044, %v1043
    %v1146 = vpack.c.b16 %v1046, %v1045
    %v1147 = vpack.c.b16 %v1048, %v1047
    %v1148 = vpack.c.b16 %v1050, %v1049
    %v1149 = vpack.c.b16 %v1052, %v1051
    %v1150 = vpack.c.b16 %v1054, %v1053
    %v1151 = vpack.c.b16 %v1056, %v1055
    %v1152 = vpack.c.b16 %v1058, %v1057
    %v1153 = vpack.c.b16 %v1060, %v1059
    %v1154 = vpack.c.b16 %v1062, %v1061
    %v1155 = vpack.c.b16 %v1064, %v1063
    %v1156 = vpack.c.b16 %v1066, %v1065
    %v1157 = vpack.c.b16 %v1068, %v1067
    %v1158 = vpack.c.b16 %v1070, %v1069
    %v1159 = vpack.c.b16 %v1072, %v1071
    %v1160 = vpack.c.b16 %v1074, %v1073
    %v1161 = vpack.c.b16 %v1076, %v1075
    %v1162 = vpack.c.b16 %v1078, %v1077
    %v1163 = vpack.c.b16 %v1080, %v1079
    %v1164 = vpack.c.b16 %v1082, %v1081
    %v1165 = vpack.c.b16 %v1084, %v1083
    %v1166 = vpack.c.b16 %v1086, %v1085
    %v1167 = vpack.c.b16 %v1088, %v1087
    %v1168 = vpack.c.b16 %v1090, %v1089
    %v1169 = vpack.c.b16 %v1092, %v1091
    %v1170 = vpack.c.b16 %v1094, %v1093
    %v1171 = vpack.c.b16 %v1096, %v1095
    %v1172 = vpack.c.b16 %v1098, %v1097
    %v1173 = vpack.c.b16 %v1100, %v1099
    %v1174 = vpack.c.b16 %v1102, %v1101
    %v1175 = vpack.c.b16 %v1104, %v1103
    %v1176 = vpack.c.b16 %v1106, %v1105
    %v1177 = vpack.c.b16 %v1108, %v1107
    %v1178 = vpack.c.b16 %v1110, %v1109
    %v1179 = vpack.c.b16 %v1112, %v1111
    %v1180 = vpack.c.b16 %v1114, %v1113
    %v1181 = vpack.c.b16 %v1116, %v1115
    %v1182 = vpack.c.b16 %v1118, %v1117
    %v1183 = vpack.c.b16 %v1120, %v1119
    %v1184 = vpack.c.b16 %v1122, %v1121
    %v1185 = vpack.c.b16 %v1124, %v1123
    %v1186 = vpack.c.b16 %v1126, %v1125
    %v1187 = vpack.c.b16 %v1128, %v1127
    %v1188 = vpack.c.b16 %v1130, %v1129
    %v1189 = vpack.c.b16 %v1132, %v1131
    %v1190 = vpack.c.b16 %v1134, %v1133
    %1247 = vmatpush.bf16.msra.mxu0 %v1142
    %1248 = vmatpush.bf16.msra.mxu0 %v1141
    %1249 = vmatpush.bf16.msra.mxu0 %v1140
    %1250 = vmatpush.bf16.msra.mxu0 %v1139
    %1251 = vmatpush.bf16.msra.mxu0 %v1138
    %1252 = vmatpush.bf16.msra.mxu0 %v1137
    %1253 = vmatpush.bf16.msra.mxu0 %v1136
    %1254 = vmatpush.bf16.msra.mxu0 %v1135
    %1255 = vmatmul.bf16.gmra.mxu0 %v883
    %v1256 = vpop.f32.mrf.mxu0
    %v1257 = vadd.f32 %v837, %v1256
    %v1258 = vpop.f32.mrf.mxu0
    %v1259 = vadd.f32 %v837, %v1258
    %1260 = vmatmul.bf16.gmra.mxu0 %v890
    %v1261 = vpop.f32.mrf.mxu0
    %v1262 = vadd.f32 %v837, %v1261
    %v1263 = vpop.f32.mrf.mxu0
    %v1264 = vadd.f32 %v837, %v1263
    %1265 = vdwg.mxu0
    %1266 = vmatpush.bf16.msra.mxu0 %v1150
    %1267 = vmatpush.bf16.msra.mxu0 %v1149
    %1268 = vmatpush.bf16.msra.mxu0 %v1148
    %1269 = vmatpush.bf16.msra.mxu0 %v1147
    %1270 = vmatpush.bf16.msra.mxu0 %v1146
    %1271 = vmatpush.bf16.msra.mxu0 %v1145
    %1272 = vmatpush.bf16.msra.mxu0 %v1144
    %1273 = vmatpush.bf16.msra.mxu0 %v1143
    %1274 = vmatmul.bf16.gmra.mxu0 %v884
    %v1275 = vpop.f32.mrf.mxu0
    %v1276 = vadd.f32 %v1257, %v1275
    %v1277 = vpop.f32.mrf.mxu0
    %v1278 = vadd.f32 %v1259, %v1277
    %1279 = vmatmul.bf16.gmra.mxu0 %v891
    %v1280 = vpop.f32.mrf.mxu0
    %v1281 = vadd.f32 %v1262, %v1280
    %v1282 = vpop.f32.mrf.mxu0
    %v1283 = vadd.f32 %v1264, %v1282
    %1284 = vdwg.mxu0
    %1285 = vmatpush.bf16.msra.mxu0 %v1158
    %1286 = vmatpush.bf16.msra.mxu0 %v1157
    %1287 = vmatpush.bf16.msra.mxu0 %v1156
    %1288 = vmatpush.bf16.msra.mxu0 %v1155
    %1289 = vmatpush.bf16.msra.mxu0 %v1154
    %1290 = vmatpush.bf16.msra.mxu0 %v1153
    %1291 = vmatpush.bf16.msra.mxu0 %v1152
    %1292 = vmatpush.bf16.msra.mxu0 %v1151
    %1293 = vmatmul.bf16.gmra.mxu0 %v885
    %v1294 = vpop.f32.mrf.mxu0
    %v1295 = vadd.f32 %v1276, %v1294
    %v1296 = vpop.f32.mrf.mxu0
    %v1297 = vadd.f32 %v1278, %v1296
    %1298 = vmatmul.bf16.gmra.mxu0 %v892
    %v1299 = vpop.f32.mrf.mxu0
    %v1300 = vadd.f32 %v1281, %v1299
    %v1301 = vpop.f32.mrf.mxu0
    %v1302 = vadd.f32 %v1283, %v1301
    %1303 = vdwg.mxu0
    %1304 = vmatpush.bf16.msra.mxu0 %v1166
    %1305 = vmatpush.bf16.msra.mxu0 %v1165
    %1306 = vmatpush.bf16.msra.mxu0 %v1164
    %1307 = vmatpush.bf16.msra.mxu0 %v1163
    %1308 = vmatpush.bf16.msra.mxu0 %v1162
    %1309 = vmatpush.bf16.msra.mxu0 %v1161
    %1310 = vmatpush.bf16.msra.mxu0 %v1160
    %1311 = vmatpush.bf16.msra.mxu0 %v1159
    %1312 = vmatmul.bf16.gmra.mxu0 %v886
    %v1313 = vpop.f32.mrf.mxu0
    %v1314 = vadd.f32 %v1295, %v1313
    %v1315 = vpop.f32.mrf.mxu0
    %v1316 = vadd.f32 %v1297, %v1315
    %1317 = vmatmul.bf16.gmra.mxu0 %v893
    %v1318 = vpop.f32.mrf.mxu0
    %v1319 = vadd.f32 %v1300, %v1318
    %v1320 = vpop.f32.mrf.mxu0
    %v1321 = vadd.f32 %v1302, %v1320
    %1322 = vdwg.mxu0
    %1323 = vmatpush.bf16.msra.mxu0 %v1174
    %1324 = vmatpush.bf16.msra.mxu0 %v1173
    %1325 = vmatpush.bf16.msra.mxu0 %v1172
    %1326 = vmatpush.bf16.msra.mxu0 %v1171
    %1327 = vmatpush.bf16.msra.mxu0 %v1170
    %1328 = vmatpush.bf16.msra.mxu0 %v1169
    %1329 = vmatpush.bf16.msra.mxu0 %v1168
    %1330 = vmatpush.bf16.msra.mxu0 %v1167
    %1331 = vmatmul.bf16.gmra.mxu0 %v887
    %v1332 = vpop.f32.mrf.mxu0
    %v1333 = vadd.f32 %v1314, %v1332
    %v1334 = vpop.f32.mrf.mxu0
    %v1335 = vadd.f32 %v1316, %v1334
    %1336 = vmatmul.bf16.gmra.mxu0 %v894
    %v1337 = vpop.f32.mrf.mxu0
    %v1338 = vadd.f32 %v1319, %v1337
    %v1339 = vpop.f32.mrf.mxu0
    %v1340 = vadd.f32 %v1321, %v1339
    %1341 = vdwg.mxu0
    %1342 = vmatpush.bf16.msra.mxu0 %v1182
    %1343 = vmatpush.bf16.msra.mxu0 %v1181
    %1344 = vmatpush.bf16.msra.mxu0 %v1180
    %1345 = vmatpush.bf16.msra.mxu0 %v1179
    %1346 = vmatpush.bf16.msra.mxu0 %v1178
    %1347 = vmatpush.bf16.msra.mxu0 %v1177
    %1348 = vmatpush.bf16.msra.mxu0 %v1176
    %1349 = vmatpush.bf16.msra.mxu0 %v1175
    %1350 = vmatmul.bf16.gmra.mxu0 %v888
    %v1351 = vpop.f32.mrf.mxu0
    %v1352 = vadd.f32 %v1333, %v1351
    %v1353 = vpop.f32.mrf.mxu0
    %v1354 = vadd.f32 %v1335, %v1353
    %1355 = vmatmul.bf16.gmra.mxu0 %v895
    %v1356 = vpop.f32.mrf.mxu0
    %v1357 = vadd.f32 %v1338, %v1356
    %v1358 = vpop.f32.mrf.mxu0
    %v1359 = vadd.f32 %v1340, %v1358
    %1360 = vdwg.mxu0
    %1361 = vmatpush.bf16.msra.mxu0 %v1190
    %1362 = vmatpush.bf16.msra.mxu0 %v1189
    %1363 = vmatpush.bf16.msra.mxu0 %v1188
    %1364 = vmatpush.bf16.msra.mxu0 %v1187
    %1365 = vmatpush.bf16.msra.mxu0 %v1186
    %1366 = vmatpush.bf16.msra.mxu0 %v1185
    %1367 = vmatpush.bf16.msra.mxu0 %v1184
    %1368 = vmatpush.bf16.msra.mxu0 %v1183
    %1369 = vmatmul.bf16.gmra.mxu0 %v889
    %v1370 = vpop.f32.mrf.mxu0
    %v1371 = vadd.f32 %v1352, %v1370
    %v1372 = vpop.f32.mrf.mxu0
    %v1373 = vadd.f32 %v1354, %v1372
    %1374 = vmatmul.bf16.gmra.mxu0 %v896
    %v1375 = vpop.f32.mrf.mxu0
    %v1376 = vadd.f32 %v1357, %v1375
    %v1377 = vpop.f32.mrf.mxu0
    %v1378 = vadd.f32 %v1359, %v1377
    %1379 = vdwg.mxu0
    %v1380 = vld [vmem:[%s7] sm:$0xf]
    %v1381 = vld [vmem:[%s7 + $0x4] sm:$0xf]
    %v1382 = vld [vmem:[%s7 + $0x8] sm:$0xf]
    %v1383 = vld [vmem:[%s7 + $0xc] sm:$0xf]
    %v1384 = vld [vmem:[%s7 + $0x10] sm:$0xf]
    %v1385 = vld [vmem:[%s7 + $0x14] sm:$0xf]
    %v1386 = vld [vmem:[%s7 + $0x18] sm:$0xf]
    %v1387 = vld [vmem:[%s7 + $0x1c] sm:$0xf]
    %v1388 = vld [vmem:[%s7 + $0x20] sm:$0xf]
    %v1389 = vld [vmem:[%s7 + $0x24] sm:$0xf]
    %v1390 = vld [vmem:[%s7 + $0x28] sm:$0xf]
    %v1391 = vld [vmem:[%s7 + $0x2c] sm:$0xf]
    %v1392 = vld [vmem:[%s7 + $0x30] sm:$0xf]
    %v1393 = vld [vmem:[%s7 + $0x34] sm:$0xf]
    %v1394 = vld [vmem:[%s7 + $0x38] sm:$0xf]
    %v1395 = vld [vmem:[%s7 + $0x3c] sm:$0xf]
    %v1396 = vld [vmem:[%s8] sm:$0x1]
    %v1397 = vld [vmem:[%s0] sm:$0xf]
    %v1398 = vld [vmem:[%s0 + $0x4] sm:$0xf]
    %1401 = vrot.lane.b32.xlu0 %v698, 112
    %v1402 = vpop.permute.xlu0 %1401
    %1403 = vrot.lane.b32.xlu0 %v700, 112
    %v1404 = vpop.permute.xlu0 %1403
    %1409 = vrot.lane.b32.xlu0 %v1371, 112
    %v1410 = vpop.permute.xlu0 %1409
    %1411 = vrot.lane.b32.xlu0 %v1373, 112
    %v1412 = vpop.permute.xlu0 %1411
    %v1415 = vpack.c.bf16 %v700, %v698
    %v1416 = vpack.c.bf16 %v1404, %v1402
    %v1419 = vunpack.c.l.b16 %v1397
    %v1420 = vunpack.c.l.b16 %v1398
    %v1421 = vpack.c.b16 %v1420, %v1419
    %vm1422 = vcmask 261120
    %v1424 = vsel %vm1422, %v1421, 0
    %1426 = vmatpush.bf16.msra.mxu0 0
    %1427 = vmatpush.bf16.msra.mxu0 0
    %1428 = vmatpush.bf16.msra.mxu0 0
    %1429 = vmatpush.bf16.msra.mxu0 0
    %1430 = vmatpush.bf16.msra.mxu0 0
    %1431 = vmatpush.bf16.msra.mxu0 0
    %1432 = vmatpush.bf16.msra.mxu0 %v1416
    %1433 = vmatpush.bf16.msra.mxu0 %v1415
    %1434 = vmatmul.bf16.gmra.mxu0 %v1424
    %v1435 = vpop.f32.mrf.mxu0
    %v1436 = vadd.f32 0.0, %v1435
    %v1437 = vpop.f32.mrf.mxu0
    %v1438 = vadd.f32 0.0, %v1437
    %1439 = vdwg.mxu0
    %v1440 = vpack.c.bf16 %v1373, %v1371
    %v1441 = vpack.c.bf16 %v1412, %v1410
    %1442 = vrot.lane.b32.xlu0 %v1421, 96
    %v1443 = vpop.permute.xlu0 %1442
    %1446 = vrot.lane.b32.xlu0 %v1415, 96
    %v1447 = vpop.permute.xlu0 %1446
    %1448 = vrot.lane.b32.xlu0 %v1416, 96
    %v1449 = vpop.permute.xlu0 %1448
    %v1453 = vsel %vm1422, %v1443, 0
    %1455 = vmatpush.bf16.msra.mxu0 0
    %1456 = vmatpush.bf16.msra.mxu0 0
    %1457 = vmatpush.bf16.msra.mxu0 0
    %1458 = vmatpush.bf16.msra.mxu0 0
    %1459 = vmatpush.bf16.msra.mxu0 0
    %1460 = vmatpush.bf16.msra.mxu0 0
    %1461 = vmatpush.bf16.msra.mxu0 %v1449
    %1462 = vmatpush.bf16.msra.mxu0 %v1447
    %1463 = vmatmul.bf16.gmra.mxu0 %v1453
    %v1464 = vpop.f32.mrf.mxu0
    %v1465 = vadd.f32 0.0, %v1464
    %v1466 = vpop.f32.mrf.mxu0
    %v1467 = vadd.f32 0.0, %v1466
    %1468 = vdwg.mxu0
    %1469 = vrot.lane.b32.xlu0 %v1421, 64
    %v1470 = vpop.permute.xlu0 %1469
    %1471 = vrot.lane.b32.xlu0 %v1415, 64
    %v1472 = vpop.permute.xlu0 %1471
    %1473 = vrot.lane.b32.xlu0 %v1416, 64
    %v1474 = vpop.permute.xlu0 %1473
    %v1478 = vsel %vm1422, %v1470, 0
    %1480 = vmatpush.bf16.msra.mxu0 0
    %1481 = vmatpush.bf16.msra.mxu0 0
    %1482 = vmatpush.bf16.msra.mxu0 0
    %1483 = vmatpush.bf16.msra.mxu0 0
    %1484 = vmatpush.bf16.msra.mxu0 0
    %1485 = vmatpush.bf16.msra.mxu0 0
    %1486 = vmatpush.bf16.msra.mxu0 %v1474
    %1487 = vmatpush.bf16.msra.mxu0 %v1472
    %1488 = vmatmul.bf16.gmra.mxu0 %v1478
    %v1489 = vpop.f32.mrf.mxu0
    %v1490 = vadd.f32 0.0, %v1489
    %v1491 = vpop.f32.mrf.mxu0
    %v1492 = vadd.f32 0.0, %v1491
    %1493 = vdwg.mxu0
    %1494 = vrot.lane.b32.xlu0 %v1421, 32
    %v1495 = vpop.permute.xlu0 %1494
    %1496 = vrot.lane.b32.xlu0 %v1415, 32
    %v1497 = vpop.permute.xlu0 %1496
    %1498 = vrot.lane.b32.xlu0 %v1416, 32
    %v1499 = vpop.permute.xlu0 %1498
    %v1503 = vsel %vm1422, %v1495, 0
    %1505 = vmatpush.bf16.msra.mxu0 0
    %1506 = vmatpush.bf16.msra.mxu0 0
    %1507 = vmatpush.bf16.msra.mxu0 0
    %1508 = vmatpush.bf16.msra.mxu0 0
    %1509 = vmatpush.bf16.msra.mxu0 0
    %1510 = vmatpush.bf16.msra.mxu0 0
    %1511 = vmatpush.bf16.msra.mxu0 %v1499
    %1512 = vmatpush.bf16.msra.mxu0 %v1497
    %1513 = vmatmul.bf16.gmra.mxu0 %v1503
    %v1514 = vpop.f32.mrf.mxu0
    %v1515 = vadd.f32 0.0, %v1514
    %v1516 = vpop.f32.mrf.mxu0
    %v1517 = vadd.f32 0.0, %v1516
    %1518 = vdwg.mxu0
    %v1519 = vmul.f32 %v1436, 0.17677669
    %v1520 = vmul.f32 %v1438, 0.17677669
    %v1521 = vmul.f32 %v1465, 0.17677669
    %v1522 = vmul.f32 %v1467, 0.17677669
    %v1523 = vmul.f32 %v1490, 0.17677669
    %v1524 = vmul.f32 %v1492, 0.17677669
    %v1525 = vmul.f32 %v1515, 0.17677669
    %v1526 = vmul.f32 %v1517, 0.17677669
    %vm1527 = vcmask 130048
    %v1528 = vsel %vm1527, %v1519, -inf
    %1529 = vmax.xlane.f32.xlu0 %v1528
    %v1530 = vpop.xlane.xlu0 %1529
    %v1531 = vsel %vm1527, %v1520, -inf
    %1532 = vmax.xlane.f32.xlu0 %v1531
    %v1533 = vpop.xlane.xlu0 %1532
    %v1534 = vsel %vm1527, %v1521, -inf
    %1535 = vmax.xlane.f32.xlu0 %v1534
    %v1536 = vpop.xlane.xlu0 %1535
    %v1537 = vsel %vm1527, %v1522, -inf
    %1538 = vmax.xlane.f32.xlu0 %v1537
    %v1539 = vpop.xlane.xlu0 %1538
    %v1540 = vsel %vm1527, %v1523, -inf
    %1541 = vmax.xlane.f32.xlu0 %v1540
    %v1542 = vpop.xlane.xlu0 %1541
    %v1543 = vsel %vm1527, %v1524, -inf
    %1544 = vmax.xlane.f32.xlu0 %v1543
    %v1545 = vpop.xlane.xlu0 %1544
    %v1546 = vsel %vm1527, %v1525, -inf
    %1547 = vmax.xlane.f32.xlu0 %v1546
    %v1548 = vpop.xlane.xlu0 %1547
    %v1549 = vsel %vm1527, %v1526, -inf
    %1550 = vmax.xlane.f32.xlu0 %v1549
    %v1551 = vpop.xlane.xlu0 %1550
    %v1552 = vsub.f32 %v1519, %v1530
    %v1553 = vsub.f32 %v1520, %v1533
    %v1554 = vsub.f32 %v1521, %v1536
    %v1555 = vsub.f32 %v1522, %v1539
    %v1556 = vsub.f32 %v1523, %v1542
    %v1557 = vsub.f32 %v1524, %v1545
    %v1558 = vsub.f32 %v1525, %v1548
    %v1559 = vsub.f32 %v1526, %v1551
    %v1560 = vmul.f32 %v1552, 1.442695
    %v1561 = vpow.pop %v1560
    %v1562 = vmul.f32 %v1553, 1.442695
    %v1563 = vpow.pop %v1562
    %v1564 = vmul.f32 %v1554, 1.442695
    %v1565 = vpow.pop %v1564
    %v1566 = vmul.f32 %v1555, 1.442695
    %v1567 = vpow.pop %v1566
    %v1568 = vmul.f32 %v1556, 1.442695
    %v1569 = vpow.pop %v1568
    %v1570 = vmul.f32 %v1557, 1.442695
    %v1571 = vpow.pop %v1570
    %v1572 = vmul.f32 %v1558, 1.442695
    %v1573 = vpow.pop %v1572
    %v1574 = vmul.f32 %v1559, 1.442695
    %v1575 = vpow.pop %v1574
    %v1576 = vsel %vm1527, %v1561, 0.0
    %1577 = vadd.xlane.f32.xlu0 %v1576
    %v1578 = vpop.xlane.xlu0 %1577
    %v1579 = vsel %vm1527, %v1563, 0.0
    %1580 = vadd.xlane.f32.xlu0 %v1579
    %v1581 = vpop.xlane.xlu0 %1580
    %v1582 = vsel %vm1527, %v1565, 0.0
    %1583 = vadd.xlane.f32.xlu0 %v1582
    %v1584 = vpop.xlane.xlu0 %1583
    %v1585 = vsel %vm1527, %v1567, 0.0
    %1586 = vadd.xlane.f32.xlu0 %v1585
    %v1587 = vpop.xlane.xlu0 %1586
    %v1588 = vsel %vm1527, %v1569, 0.0
    %1589 = vadd.xlane.f32.xlu0 %v1588
    %v1590 = vpop.xlane.xlu0 %1589
    %v1591 = vsel %vm1527, %v1571, 0.0
    %1592 = vadd.xlane.f32.xlu0 %v1591
    %v1593 = vpop.xlane.xlu0 %1592
    %v1594 = vsel %vm1527, %v1573, 0.0
    %1595 = vadd.xlane.f32.xlu0 %v1594
    %v1596 = vpop.xlane.xlu0 %1595
    %v1597 = vsel %vm1527, %v1575, 0.0
    %1598 = vadd.xlane.f32.xlu0 %v1597
    %v1599 = vpop.xlane.xlu0 %1598
    %v1600 = vrcp.pop %v1578
    %v1601 = vrcp.pop %v1581
    %v1602 = vrcp.pop %v1584
    %v1603 = vrcp.pop %v1587
    %v1604 = vrcp.pop %v1590
    %v1605 = vrcp.pop %v1593
    %v1606 = vrcp.pop %v1596
    %v1607 = vrcp.pop %v1599
    %v1608 = vmul.f32 %v1561, %v1600
    %v1609 = vmul.f32 %v1563, %v1601
    %v1610 = vmul.f32 %v1565, %v1602
    %v1611 = vmul.f32 %v1567, %v1603
    %v1612 = vmul.f32 %v1569, %v1604
    %v1613 = vmul.f32 %v1571, %v1605
    %v1614 = vmul.f32 %v1573, %v1606
    %v1615 = vmul.f32 %v1575, %v1607
    %v1616 = vpack.c.bf16 %v1608, %v1608
    %v1617 = vpack.c.bf16 %v1609, %v1609
    %v1618 = vpack.c.bf16 %v1610, %v1610
    %v1619 = vpack.c.bf16 %v1611, %v1611
    %v1620 = vpack.c.bf16 %v1612, %v1612
    %v1621 = vpack.c.bf16 %v1613, %v1613
    %v1622 = vpack.c.bf16 %v1614, %v1614
    %v1623 = vpack.c.bf16 %v1615, %v1615
    %v1626 = vunpack.c.l.b16 %v1616
    %v1627 = vunpack.c.l.b16 %v1617
    %v1628 = vpack.c.b16 %v1627, %v1626
    %v1630 = vsel %vm1527, %v1628, 0
    %v1633 = vsel %vm1527, %v1440, 0
    %v1636 = vsel %vm1527, %v1441, 0
    %1638 = vmatpush.bf16.xpose.msra.mxu0 0
    %1639 = vmatpush.bf16.xpose.msra.mxu0 0
    %1640 = vmatpush.bf16.xpose.msra.mxu0 0
    %1641 = vmatpush.bf16.xpose.msra.mxu0 0
    %1642 = vmatpush.bf16.xpose.msra.mxu0 0
    %1643 = vmatpush.bf16.xpose.msra.mxu0 0
    %1644 = vmatpush.bf16.xpose.msra.mxu0 %v1636
    %1645 = vmatpush.bf16.xpose.msra.mxu0 %v1633
    %1646 = vmatmul.bf16.gmra.mxu0 %v1630
    %v1647 = vpop.f32.mrf.mxu0
    %v1648 = vadd.f32 0.0, %v1647
    %v1649 = vpop.f32.mrf.mxu0
    %v1650 = vadd.f32 0.0, %v1649
    %1651 = vdwg.mxu0
    %v1654 = vunpack.c.l.b16 %v1618
    %v1655 = vunpack.c.l.b16 %v1619
    %v1656 = vpack.c.b16 %v1655, %v1654
    %1659 = vrot.lane.b32.xlu0 %v1440, 96
    %v1660 = vpop.permute.xlu0 %1659
    %1661 = vrot.lane.b32.xlu0 %v1441, 96
    %v1662 = vpop.permute.xlu0 %1661
    %v1664 = vsel %vm1527, %v1656, 0
    %v1667 = vsel %vm1527, %v1660, 0
    %v1670 = vsel %vm1527, %v1662, 0
    %1672 = vmatpush.bf16.xpose.msra.mxu0 0
    %1673 = vmatpush.bf16.xpose.msra.mxu0 0
    %1674 = vmatpush.bf16.xpose.msra.mxu0 0
    %1675 = vmatpush.bf16.xpose.msra.mxu0 0
    %1676 = vmatpush.bf16.xpose.msra.mxu0 0
    %1677 = vmatpush.bf16.xpose.msra.mxu0 0
    %1678 = vmatpush.bf16.xpose.msra.mxu0 %v1670
    %1679 = vmatpush.bf16.xpose.msra.mxu0 %v1667
    %1680 = vmatmul.bf16.gmra.mxu0 %v1664
    %v1681 = vpop.f32.mrf.mxu0
    %v1682 = vadd.f32 0.0, %v1681
    %v1683 = vpop.f32.mrf.mxu0
    %v1684 = vadd.f32 0.0, %v1683
    %1685 = vdwg.mxu0
    %v1688 = vunpack.c.l.b16 %v1620
    %v1689 = vunpack.c.l.b16 %v1621
    %v1690 = vpack.c.b16 %v1689, %v1688
    %1691 = vrot.lane.b32.xlu0 %v1440, 64
    %v1692 = vpop.permute.xlu0 %1691
    %1693 = vrot.lane.b32.xlu0 %v1441, 64
    %v1694 = vpop.permute.xlu0 %1693
    %v1696 = vsel %vm1527, %v1690, 0
    %v1699 = vsel %vm1527, %v1692, 0
    %v1702 = vsel %vm1527, %v1694, 0
    %1704 = vmatpush.bf16.xpose.msra.mxu0 0
    %1705 = vmatpush.bf16.xpose.msra.mxu0 0
    %1706 = vmatpush.bf16.xpose.msra.mxu0 0
    %1707 = vmatpush.bf16.xpose.msra.mxu0 0
    %1708 = vmatpush.bf16.xpose.msra.mxu0 0
    %1709 = vmatpush.bf16.xpose.msra.mxu0 0
    %1710 = vmatpush.bf16.xpose.msra.mxu0 %v1702
    %1711 = vmatpush.bf16.xpose.msra.mxu0 %v1699
    %1712 = vmatmul.bf16.gmra.mxu0 %v1696
    %v1713 = vpop.f32.mrf.mxu0
    %v1714 = vadd.f32 0.0, %v1713
    %v1715 = vpop.f32.mrf.mxu0
    %v1716 = vadd.f32 0.0, %v1715
    %1717 = vdwg.mxu0
    %v1720 = vunpack.c.l.b16 %v1622
    %v1721 = vunpack.c.l.b16 %v1623
    %v1722 = vpack.c.b16 %v1721, %v1720
    %1723 = vrot.lane.b32.xlu0 %v1440, 32
    %v1724 = vpop.permute.xlu0 %1723
    %1725 = vrot.lane.b32.xlu0 %v1441, 32
    %v1726 = vpop.permute.xlu0 %1725
    %v1728 = vsel %vm1527, %v1722, 0
    %v1731 = vsel %vm1527, %v1724, 0
    %v1734 = vsel %vm1527, %v1726, 0
    %1736 = vmatpush.bf16.xpose.msra.mxu0 0
    %1737 = vmatpush.bf16.xpose.msra.mxu0 0
    %1738 = vmatpush.bf16.xpose.msra.mxu0 0
    %1739 = vmatpush.bf16.xpose.msra.mxu0 0
    %1740 = vmatpush.bf16.xpose.msra.mxu0 0
    %1741 = vmatpush.bf16.xpose.msra.mxu0 0
    %1742 = vmatpush.bf16.xpose.msra.mxu0 %v1734
    %1743 = vmatpush.bf16.xpose.msra.mxu0 %v1731
    %1744 = vmatmul.bf16.gmra.mxu0 %v1728
    %v1745 = vpop.f32.mrf.mxu0
    %v1746 = vadd.f32 0.0, %v1745
    %v1747 = vpop.f32.mrf.mxu0
    %v1748 = vadd.f32 0.0, %v1747
    %1749 = vdwg.mxu0
    %1752 = vrot.lane.b32.xlu0 %v1682, 32
    %v1753 = vpop.permute.xlu0 %1752
    %1754 = vrot.lane.b32.xlu0 %v1684, 32
    %v1755 = vpop.permute.xlu0 %1754
    %1760 = vrot.lane.b32.xlu0 %v1714, 64
    %v1761 = vpop.permute.xlu0 %1760
    %1762 = vrot.lane.b32.xlu0 %v1716, 64
    %v1763 = vpop.permute.xlu0 %1762
    %1768 = vrot.lane.b32.xlu0 %v1746, 96
    %v1769 = vpop.permute.xlu0 %1768
    %1770 = vrot.lane.b32.xlu0 %v1748, 96
    %v1771 = vpop.permute.xlu0 %1770
    %v1774 = vsel %vm1422, %v1648, %v1753
    %v1775 = vsel %vm1422, %v1650, %v1755
    %vm1776 = vcmask 523264
    %v1777 = vsel %vm1776, %v1774, %v1761
    %v1778 = vsel %vm1776, %v1775, %v1763
    %vm1779 = vcmask 785408
    %v1780 = vsel %vm1779, %v1777, %v1769
    %v1781 = vsel %vm1779, %v1778, %v1771
    %v1782 = vpack.c.bf16 %v1781, %v1780
    %v1784 = vperm.slane %v1396, 0
    %v1802 = vunpack.c.l.b16 %v1380
    %v1803 = vunpack.c.l.b16 %v1381
    %v1804 = vunpack.c.l.b16 %v1382
    %v1805 = vunpack.c.l.b16 %v1383
    %v1806 = vunpack.c.l.b16 %v1384
    %v1807 = vunpack.c.l.b16 %v1385
    %v1808 = vunpack.c.l.b16 %v1386
    %v1809 = vunpack.c.l.b16 %v1387
    %v1810 = vunpack.c.l.b16 %v1388
    %v1811 = vunpack.c.l.b16 %v1389
    %v1812 = vunpack.c.l.b16 %v1390
    %v1813 = vunpack.c.l.b16 %v1391
    %v1814 = vunpack.c.l.b16 %v1392
    %v1815 = vunpack.c.l.b16 %v1393
    %v1816 = vunpack.c.l.b16 %v1394
    %v1817 = vunpack.c.l.b16 %v1395
    %v1818 = vpack.c.b16 %v1803, %v1802
    %v1819 = vpack.c.b16 %v1805, %v1804
    %v1820 = vpack.c.b16 %v1807, %v1806
    %v1821 = vpack.c.b16 %v1809, %v1808
    %v1822 = vpack.c.b16 %v1811, %v1810
    %v1823 = vpack.c.b16 %v1813, %v1812
    %v1824 = vpack.c.b16 %v1815, %v1814
    %v1825 = vpack.c.b16 %v1817, %v1816
    %1834 = vmatpush.bf16.msra.mxu0 %v1825
    %1835 = vmatpush.bf16.msra.mxu0 %v1824
    %1836 = vmatpush.bf16.msra.mxu0 %v1823
    %1837 = vmatpush.bf16.msra.mxu0 %v1822
    %1838 = vmatpush.bf16.msra.mxu0 %v1821
    %1839 = vmatpush.bf16.msra.mxu0 %v1820
    %1840 = vmatpush.bf16.msra.mxu0 %v1819
    %1841 = vmatpush.bf16.msra.mxu0 %v1818
    %1842 = vmatmul.bf16.gmra.mxu0 %v1782
    %v1843 = vpop.f32.mrf.mxu0
    %v1844 = vadd.f32 %v1784, %v1843
    %v1845 = vpop.f32.mrf.mxu0
    %v1846 = vadd.f32 %v1784, %v1845
    %1847 = vdwg.mxu0
    %1848 = vst [vmem:[#allocation2] sm:$0xff] %v1844
    %1849 = vst [vmem:[#allocation2 + $0x8] sm:$0xff] %v1846
    %v1850 = vld [vmem:[%s0 + $0x8] sm:$0xf]
    %v1851 = vld [vmem:[%s0 + $0xc] sm:$0xf]
    %1854 = vrot.lane.b32.xlu0 %v703, 112
    %v1855 = vpop.permute.xlu0 %1854
    %1856 = vrot.lane.b32.xlu0 %v705, 112
    %v1857 = vpop.permute.xlu0 %1856
    %1862 = vrot.lane.b32.xlu0 %v1376, 112
    %v1863 = vpop.permute.xlu0 %1862
    %1864 = vrot.lane.b32.xlu0 %v1378, 112
    %v1865 = vpop.permute.xlu0 %1864
    %v1868 = vpack.c.bf16 %v705, %v703
    %v1869 = vpack.c.bf16 %v1857, %v1855
    %v1872 = vunpack.c.l.b16 %v1850
    %v1873 = vunpack.c.l.b16 %v1851
    %v1874 = vpack.c.b16 %v1873, %v1872
    %v1876 = vsel %vm1422, %v1874, 0
    %1878 = vmatpush.bf16.msra.mxu0 0
    %1879 = vmatpush.bf16.msra.mxu0 0
    %1880 = vmatpush.bf16.msra.mxu0 0
    %1881 = vmatpush.bf16.msra.mxu0 0
    %1882 = vmatpush.bf16.msra.mxu0 0
    %1883 = vmatpush.bf16.msra.mxu0 0
    %1884 = vmatpush.bf16.msra.mxu0 %v1869
    %1885 = vmatpush.bf16.msra.mxu0 %v1868
    %1886 = vmatmul.bf16.gmra.mxu0 %v1876
    %v1887 = vpop.f32.mrf.mxu0
    %v1888 = vadd.f32 0.0, %v1887
    %v1889 = vpop.f32.mrf.mxu0
    %v1890 = vadd.f32 0.0, %v1889
    %1891 = vdwg.mxu0
    %v1892 = vpack.c.bf16 %v1378, %v1376
    %v1893 = vpack.c.bf16 %v1865, %v1863
    %1894 = vrot.lane.b32.xlu0 %v1874, 96
    %v1895 = vpop.permute.xlu0 %1894
    %1898 = vrot.lane.b32.xlu0 %v1868, 96
    %v1899 = vpop.permute.xlu0 %1898
    %1900 = vrot.lane.b32.xlu0 %v1869, 96
    %v1901 = vpop.permute.xlu0 %1900
    %v1905 = vsel %vm1422, %v1895, 0
    %1907 = vmatpush.bf16.msra.mxu0 0
    %1908 = vmatpush.bf16.msra.mxu0 0
    %1909 = vmatpush.bf16.msra.mxu0 0
    %1910 = vmatpush.bf16.msra.mxu0 0
    %1911 = vmatpush.bf16.msra.mxu0 0
    %1912 = vmatpush.bf16.msra.mxu0 0
    %1913 = vmatpush.bf16.msra.mxu0 %v1901
    %1914 = vmatpush.bf16.msra.mxu0 %v1899
    %1915 = vmatmul.bf16.gmra.mxu0 %v1905
    %v1916 = vpop.f32.mrf.mxu0
    %v1917 = vadd.f32 0.0, %v1916
    %v1918 = vpop.f32.mrf.mxu0
    %v1919 = vadd.f32 0.0, %v1918
    %1920 = vdwg.mxu0
    %1921 = vrot.lane.b32.xlu0 %v1874, 64
    %v1922 = vpop.permute.xlu0 %1921
    %1923 = vrot.lane.b32.xlu0 %v1868, 64
    %v1924 = vpop.permute.xlu0 %1923
    %1925 = vrot.lane.b32.xlu0 %v1869, 64
    %v1926 = vpop.permute.xlu0 %1925
    %v1930 = vsel %vm1422, %v1922, 0
    %1932 = vmatpush.bf16.msra.mxu0 0
    %1933 = vmatpush.bf16.msra.mxu0 0
    %1934 = vmatpush.bf16.msra.mxu0 0
    %1935 = vmatpush.bf16.msra.mxu0 0
    %1936 = vmatpush.bf16.msra.mxu0 0
    %1937 = vmatpush.bf16.msra.mxu0 0
    %1938 = vmatpush.bf16.msra.mxu0 %v1926
    %1939 = vmatpush.bf16.msra.mxu0 %v1924
    %1940 = vmatmul.bf16.gmra.mxu0 %v1930
    %v1941 = vpop.f32.mrf.mxu0
    %v1942 = vadd.f32 0.0, %v1941
    %v1943 = vpop.f32.mrf.mxu0
    %v1944 = vadd.f32 0.0, %v1943
    %1945 = vdwg.mxu0
    %1946 = vrot.lane.b32.xlu0 %v1874, 32
    %v1947 = vpop.permute.xlu0 %1946
    %1948 = vrot.lane.b32.xlu0 %v1868, 32
    %v1949 = vpop.permute.xlu0 %1948
    %1950 = vrot.lane.b32.xlu0 %v1869, 32
    %v1951 = vpop.permute.xlu0 %1950
    %v1955 = vsel %vm1422, %v1947, 0
    %1957 = vmatpush.bf16.msra.mxu0 0
    %1958 = vmatpush.bf16.msra.mxu0 0
    %1959 = vmatpush.bf16.msra.mxu0 0
    %1960 = vmatpush.bf16.msra.mxu0 0
    %1961 = vmatpush.bf16.msra.mxu0 0
    %1962 = vmatpush.bf16.msra.mxu0 0
    %1963 = vmatpush.bf16.msra.mxu0 %v1951
    %1964 = vmatpush.bf16.msra.mxu0 %v1949
    %1965 = vmatmul.bf16.gmra.mxu0 %v1955
    %v1966 = vpop.f32.mrf.mxu0
    %v1967 = vadd.f32 0.0, %v1966
    %v1968 = vpop.f32.mrf.mxu0
    %v1969 = vadd.f32 0.0, %v1968
    %1970 = vdwg.mxu0
    %v1971 = vmul.f32 %v1888, 0.17677669
    %v1972 = vmul.f32 %v1890, 0.17677669
    %v1973 = vmul.f32 %v1917, 0.17677669
    %v1974 = vmul.f32 %v1919, 0.17677669
    %v1975 = vmul.f32 %v1942, 0.17677669
    %v1976 = vmul.f32 %v1944, 0.17677669
    %v1977 = vmul.f32 %v1967, 0.17677669
    %v1978 = vmul.f32 %v1969, 0.17677669
    %v1979 = vsel %vm1527, %v1971, -inf
    %1980 = vmax.xlane.f32.xlu0 %v1979
    %v1981 = vpop.xlane.xlu0 %1980
    %v1982 = vsel %vm1527, %v1972, -inf
    %1983 = vmax.xlane.f32.xlu0 %v1982
    %v1984 = vpop.xlane.xlu0 %1983
    %v1985 = vsel %vm1527, %v1973, -inf
    %1986 = vmax.xlane.f32.xlu0 %v1985
    %v1987 = vpop.xlane.xlu0 %1986
    %v1988 = vsel %vm1527, %v1974, -inf
    %1989 = vmax.xlane.f32.xlu0 %v1988
    %v1990 = vpop.xlane.xlu0 %1989
    %v1991 = vsel %vm1527, %v1975, -inf
    %1992 = vmax.xlane.f32.xlu0 %v1991
    %v1993 = vpop.xlane.xlu0 %1992
    %v1994 = vsel %vm1527, %v1976, -inf
    %1995 = vmax.xlane.f32.xlu0 %v1994
    %v1996 = vpop.xlane.xlu0 %1995
    %v1997 = vsel %vm1527, %v1977, -inf
    %1998 = vmax.xlane.f32.xlu0 %v1997
    %v1999 = vpop.xlane.xlu0 %1998
    %v2000 = vsel %vm1527, %v1978, -inf
    %2001 = vmax.xlane.f32.xlu0 %v2000
    %v2002 = vpop.xlane.xlu0 %2001
    %v2003 = vsub.f32 %v1971, %v1981
    %v2004 = vsub.f32 %v1972, %v1984
    %v2005 = vsub.f32 %v1973, %v1987
    %v2006 = vsub.f32 %v1974, %v1990
    %v2007 = vsub.f32 %v1975, %v1993
    %v2008 = vsub.f32 %v1976, %v1996
    %v2009 = vsub.f32 %v1977, %v1999
    %v2010 = vsub.f32 %v1978, %v2002
    %v2011 = vmul.f32 %v2003, 1.442695
    %v2012 = vpow.pop %v2011
    %v2013 = vmul.f32 %v2004, 1.442695
    %v2014 = vpow.pop %v2013
    %v2015 = vmul.f32 %v2005, 1.442695
    %v2016 = vpow.pop %v2015
    %v2017 = vmul.f32 %v2006, 1.442695
    %v2018 = vpow.pop %v2017
    %v2019 = vmul.f32 %v2007, 1.442695
    %v2020 = vpow.pop %v2019
    %v2021 = vmul.f32 %v2008, 1.442695
    %v2022 = vpow.pop %v2021
    %v2023 = vmul.f32 %v2009, 1.442695
    %v2024 = vpow.pop %v2023
    %v2025 = vmul.f32 %v2010, 1.442695
    %v2026 = vpow.pop %v2025
    %v2027 = vsel %vm1527, %v2012, 0.0
    %2028 = vadd.xlane.f32.xlu0 %v2027
    %v2029 = vpop.xlane.xlu0 %2028
    %v2030 = vsel %vm1527, %v2014, 0.0
    %2031 = vadd.xlane.f32.xlu0 %v2030
    %v2032 = vpop.xlane.xlu0 %2031
    %v2033 = vsel %vm1527, %v2016, 0.0
    %2034 = vadd.xlane.f32.xlu0 %v2033
    %v2035 = vpop.xlane.xlu0 %2034
    %v2036 = vsel %vm1527, %v2018, 0.0
    %2037 = vadd.xlane.f32.xlu0 %v2036
    %v2038 = vpop.xlane.xlu0 %2037
    %v2039 = vsel %vm1527, %v2020, 0.0
    %2040 = vadd.xlane.f32.xlu0 %v2039
    %v2041 = vpop.xlane.xlu0 %2040
    %v2042 = vsel %vm1527, %v2022, 0.0
    %2043 = vadd.xlane.f32.xlu0 %v2042
    %v2044 = vpop.xlane.xlu0 %2043
    %v2045 = vsel %vm1527, %v2024, 0.0
    %2046 = vadd.xlane.f32.xlu0 %v2045
    %v2047 = vpop.xlane.xlu0 %2046
    %v2048 = vsel %vm1527, %v2026, 0.0
    %2049 = vadd.xlane.f32.xlu0 %v2048
    %v2050 = vpop.xlane.xlu0 %2049
    %v2051 = vrcp.pop %v2029
    %v2052 = vrcp.pop %v2032
    %v2053 = vrcp.pop %v2035
    %v2054 = vrcp.pop %v2038
    %v2055 = vrcp.pop %v2041
    %v2056 = vrcp.pop %v2044
    %v2057 = vrcp.pop %v2047
    %v2058 = vrcp.pop %v2050
    %v2059 = vmul.f32 %v2012, %v2051
    %v2060 = vmul.f32 %v2014, %v2052
    %v2061 = vmul.f32 %v2016, %v2053
    %v2062 = vmul.f32 %v2018, %v2054
    %v2063 = vmul.f32 %v2020, %v2055
    %v2064 = vmul.f32 %v2022, %v2056
    %v2065 = vmul.f32 %v2024, %v2057
    %v2066 = vmul.f32 %v2026, %v2058
    %v2067 = vpack.c.bf16 %v2059, %v2059
    %v2068 = vpack.c.bf16 %v2060, %v2060
    %v2069 = vpack.c.bf16 %v2061, %v2061
    %v2070 = vpack.c.bf16 %v2062, %v2062
    %v2071 = vpack.c.bf16 %v2063, %v2063
    %v2072 = vpack.c.bf16 %v2064, %v2064
    %v2073 = vpack.c.bf16 %v2065, %v2065
    %v2074 = vpack.c.bf16 %v2066, %v2066
    %v2077 = vunpack.c.l.b16 %v2067
    %v2078 = vunpack.c.l.b16 %v2068
    %v2079 = vpack.c.b16 %v2078, %v2077
    %v2081 = vsel %vm1527, %v2079, 0
    %v2084 = vsel %vm1527, %v1892, 0
    %v2087 = vsel %vm1527, %v1893, 0
    %2089 = vmatpush.bf16.xpose.msra.mxu0 0
    %2090 = vmatpush.bf16.xpose.msra.mxu0 0
    %2091 = vmatpush.bf16.xpose.msra.mxu0 0
    %2092 = vmatpush.bf16.xpose.msra.mxu0 0
    %2093 = vmatpush.bf16.xpose.msra.mxu0 0
    %2094 = vmatpush.bf16.xpose.msra.mxu0 0
    %2095 = vmatpush.bf16.xpose.msra.mxu0 %v2087
    %2096 = vmatpush.bf16.xpose.msra.mxu0 %v2084
    %2097 = vmatmul.bf16.gmra.mxu0 %v2081
    %v2098 = vpop.f32.mrf.mxu0
    %v2099 = vadd.f32 0.0, %v2098
    %v2100 = vpop.f32.mrf.mxu0
    %v2101 = vadd.f32 0.0, %v2100
    %2102 = vdwg.mxu0
    %v2105 = vunpack.c.l.b16 %v2069
    %v2106 = vunpack.c.l.b16 %v2070
    %v2107 = vpack.c.b16 %v2106, %v2105
    %2110 = vrot.lane.b32.xlu0 %v1892, 96
    %v2111 = vpop.permute.xlu0 %2110
    %2112 = vrot.lane.b32.xlu0 %v1893, 96
    %v2113 = vpop.permute.xlu0 %2112
    %v2115 = vsel %vm1527, %v2107, 0
    %v2118 = vsel %vm1527, %v2111, 0
    %v2121 = vsel %vm1527, %v2113, 0
    %2123 = vmatpush.bf16.xpose.msra.mxu0 0
    %2124 = vmatpush.bf16.xpose.msra.mxu0 0
    %2125 = vmatpush.bf16.xpose.msra.mxu0 0
    %2126 = vmatpush.bf16.xpose.msra.mxu0 0
    %2127 = vmatpush.bf16.xpose.msra.mxu0 0
    %2128 = vmatpush.bf16.xpose.msra.mxu0 0
    %2129 = vmatpush.bf16.xpose.msra.mxu0 %v2121
    %2130 = vmatpush.bf16.xpose.msra.mxu0 %v2118
    %2131 = vmatmul.bf16.gmra.mxu0 %v2115
    %v2132 = vpop.f32.mrf.mxu0
    %v2133 = vadd.f32 0.0, %v2132
    %v2134 = vpop.f32.mrf.mxu0
    %v2135 = vadd.f32 0.0, %v2134
    %2136 = vdwg.mxu0
    %v2139 = vunpack.c.l.b16 %v2071
    %v2140 = vunpack.c.l.b16 %v2072
    %v2141 = vpack.c.b16 %v2140, %v2139
    %2142 = vrot.lane.b32.xlu0 %v1892, 64
    %v2143 = vpop.permute.xlu0 %2142
    %2144 = vrot.lane.b32.xlu0 %v1893, 64
    %v2145 = vpop.permute.xlu0 %2144
    %v2147 = vsel %vm1527, %v2141, 0
    %v2150 = vsel %vm1527, %v2143, 0
    %v2153 = vsel %vm1527, %v2145, 0
    %2155 = vmatpush.bf16.xpose.msra.mxu0 0
    %2156 = vmatpush.bf16.xpose.msra.mxu0 0
    %2157 = vmatpush.bf16.xpose.msra.mxu0 0
    %2158 = vmatpush.bf16.xpose.msra.mxu0 0
    %2159 = vmatpush.bf16.xpose.msra.mxu0 0
    %2160 = vmatpush.bf16.xpose.msra.mxu0 0
    %2161 = vmatpush.bf16.xpose.msra.mxu0 %v2153
    %2162 = vmatpush.bf16.xpose.msra.mxu0 %v2150
    %2163 = vmatmul.bf16.gmra.mxu0 %v2147
    %v2164 = vpop.f32.mrf.mxu0
    %v2165 = vadd.f32 0.0, %v2164
    %v2166 = vpop.f32.mrf.mxu0
    %v2167 = vadd.f32 0.0, %v2166
    %2168 = vdwg.mxu0
    %v2171 = vunpack.c.l.b16 %v2073
    %v2172 = vunpack.c.l.b16 %v2074
    %v2173 = vpack.c.b16 %v2172, %v2171
    %2174 = vrot.lane.b32.xlu0 %v1892, 32
    %v2175 = vpop.permute.xlu0 %2174
    %2176 = vrot.lane.b32.xlu0 %v1893, 32
    %v2177 = vpop.permute.xlu0 %2176
    %v2179 = vsel %vm1527, %v2173, 0
    %v2182 = vsel %vm1527, %v2175, 0
    %v2185 = vsel %vm1527, %v2177, 0
    %2187 = vmatpush.bf16.xpose.msra.mxu0 0
    %2188 = vmatpush.bf16.xpose.msra.mxu0 0
    %2189 = vmatpush.bf16.xpose.msra.mxu0 0
    %2190 = vmatpush.bf16.xpose.msra.mxu0 0
    %2191 = vmatpush.bf16.xpose.msra.mxu0 0
    %2192 = vmatpush.bf16.xpose.msra.mxu0 0
    %2193 = vmatpush.bf16.xpose.msra.mxu0 %v2185
    %2194 = vmatpush.bf16.xpose.msra.mxu0 %v2182
    %2195 = vmatmul.bf16.gmra.mxu0 %v2179
    %v2196 = vpop.f32.mrf.mxu0
    %v2197 = vadd.f32 0.0, %v2196
    %v2198 = vpop.f32.mrf.mxu0
    %v2199 = vadd.f32 0.0, %v2198
    %2200 = vdwg.mxu0
    %2203 = vrot.lane.b32.xlu0 %v2133, 32
    %v2204 = vpop.permute.xlu0 %2203
    %2205 = vrot.lane.b32.xlu0 %v2135, 32
    %v2206 = vpop.permute.xlu0 %2205
    %2211 = vrot.lane.b32.xlu0 %v2165, 64
    %v2212 = vpop.permute.xlu0 %2211
    %2213 = vrot.lane.b32.xlu0 %v2167, 64
    %v2214 = vpop.permute.xlu0 %2213
    %2219 = vrot.lane.b32.xlu0 %v2197, 96
    %v2220 = vpop.permute.xlu0 %2219
    %2221 = vrot.lane.b32.xlu0 %v2199, 96
    %v2222 = vpop.permute.xlu0 %2221
    %v2225 = vsel %vm1422, %v2099, %v2204
    %v2226 = vsel %vm1422, %v2101, %v2206
    %v2227 = vsel %vm1776, %v2225, %v2212
    %v2228 = vsel %vm1776, %v2226, %v2214
    %v2229 = vsel %vm1779, %v2227, %v2220
    %v2230 = vsel %vm1779, %v2228, %v2222
    %v2231 = vpack.c.bf16 %v2230, %v2229
    %2232 = vmatpush.bf16.msra.mxu0 %v1825
    %2233 = vmatpush.bf16.msra.mxu0 %v1824
    %2234 = vmatpush.bf16.msra.mxu0 %v1823
    %2235 = vmatpush.bf16.msra.mxu0 %v1822
    %2236 = vmatpush.bf16.msra.mxu0 %v1821
    %2237 = vmatpush.bf16.msra.mxu0 %v1820
    %2238 = vmatpush.bf16.msra.mxu0 %v1819
    %2239 = vmatpush.bf16.msra.mxu0 %v1818
    %2240 = vmatmul.bf16.gmra.mxu0 %v2231
    %v2241 = vpop.f32.mrf.mxu0
    %v2242 = vadd.f32 %v1784, %v2241
    %v2243 = vpop.f32.mrf.mxu0
    %v2244 = vadd.f32 %v1784, %v2243
    %2245 = vdwg.mxu0
    %2246 = vst [vmem:[#allocation2 + $0x10] sm:$0xff] %v2242
    %2247 = vst [vmem:[#allocation2 + $0x18] sm:$0xff] %v2244
    // Predicated region
    $region38: #{_forward_impl.1} parent=1 // pred_check
      _
    $region39: #{_forward_impl.1} parent=1 // pred_check_branch
      %2249 = sbr.rel (0) target = $region41
    $region40: #{_forward_impl.1} parent=1 // pred_region
      %2251 = vsyncadd [#allocation3], 0
      %s2252 = sshll.u32 [#allocation2], 4
      %s2253 = int_to_ptr.vmem [resolvable:$true] %s2252
      %s2254 = sshll.u32 %s9, 4
      %s2255 = int_to_ptr.hbm [resolvable:$true] %s2254
      %2260 = dma.vmem_to_hbm [thread:$0]  %s2253, 512, %s2255, [#allocation3], 128, 128, 8
    $region41: #{_forward_impl.1} parent=1 // pred_fallthru
      _
    // Predicated region
    $region42: #{_forward_impl.1} parent=1 // pred_check
      _
    $region43: #{_forward_impl.1} parent=1 // pred_check_branch
      %2262 = sbr.rel (0) target = $region45
    $region44: #{_forward_impl.1} parent=1 // pred_region
      %2264 = dma.done [#allocation3], 512
    $region45: #{_forward_impl.1} parent=1 // pred_fallthru
      _
    %2265 = vsyncpa [#allocation3], 1

</llo_original>
